<compile_context>
chip_gen: v5e
topology: v5e:2x2
jax: 0.10.0
libtpu: 0.0.40
codegen_flags: <defaults>
</compile_context>

<pallas_src>
import functools
import math

import jax
import jax.numpy as jnp
from jax.experimental import pallas as pl
from jax.experimental.pallas import tpu as pltpu

LEAKY_SLOPE = 0.01  # torch.nn.LeakyReLU default negative_slope


def _round_up(x, m):
    return ((x + m - 1) // m) * m


def _vpu_supports_native_bf16():
    # v6e/v7x VALUs are bf16-native; v5e/v5p (and older) are not -> keep h elementwise f32 there.
    try:
        kind = jax.devices()[0].device_kind.lower()
    except Exception:
        return True
    return not any(t in kind for t in ("v2", "v3", "v4", "v5"))


# ----------------------------------------------------------------------------------
# Fused Pallas kernel: SO2OutV + SO2OutU heads (transposed, lane-dense layout).
#   x_ref  : (D, tn)       packed [scalars | even(k-major,rep-minor) | odd] activations
#   cs_ref : (2L, tn) f32  rows [cos(k*theta) k=1..L | sin(k*theta) k=1..L]
#   w1_ref : (2H+1, D+1)   both heads stacked + const-1 row; bias col at index n_scalars
#   w2_ref : (3, 2H+1)     block-diagonal (v0,v1,u) + b2 in last column
#   scr_ref: (D+1, tn)     de-rotated activation incl. constant-1 bias row
# ----------------------------------------------------------------------------------
def _so2_heads_kernel(x_ref, cs_ref, w1_ref, w2_ref, out_ref, scr_ref, *,
                      n_scalars, num_rep, L_max, h_dtype):
    R = num_rep * L_max
    cs = cs_ref[...]                                     # (2L, tn) f32, loaded once

    # static rows of the MLP input: scalars, then a constant-1 row that carries b1
    scr_ref[pl.ds(0, n_scalars), :] = x_ref[pl.ds(0, n_scalars), :]
    scr_ref[pl.ds(n_scalars, 1), :] = jnp.ones((1, scr_ref.shape[1]), scr_ref.dtype)

    # SO(2) de-rotation, fused per harmonic k: (xe, xo) @ R(k*theta)^T with
    # R = [[c,-s],[s,c]].  k-major/rep-minor row layout keeps every slice sublane-contiguous
    # and avoids any broadcast matmul / relayout of the trig rows.
    # TODO(synk): get_rot() not provided; assumes standard R(theta) — the de-rotation here
    # and the re-rotation epilogue below are exact transposes (equivariance property).
    for k in range(L_max):
        c_k = cs[k:k + 1, :]
        s_k = cs[L_max + k:L_max + k + 1, :]
        xe = x_ref[pl.ds(n_scalars + k * num_rep, num_rep), :].astype(jnp.float32)
        xo = x_ref[pl.ds(n_scalars + R + k * num_rep, num_rep), :].astype(jnp.float32)
        scr_ref[pl.ds(n_scalars + 1 + k * num_rep, num_rep), :] = \
            (xe * c_k - xo * s_k).astype(scr_ref.dtype)
        scr_ref[pl.ds(n_scalars + 1 + R + k * num_rep, num_rep), :] = \
            (xe * s_k + xo * c_k).astype(scr_ref.dtype)

    # single K=D+1 matmul for BOTH heads (+ const-1 output row), f32 accumulation
    h = jnp.dot(w1_ref[...], scr_ref[...], preferred_element_type=jnp.float32)  # (2H+1, tn)
    h = h.astype(h_dtype)
    h = jnp.maximum(h, LEAKY_SLOPE * h)                  # LeakyReLU: mul + max only

    o = jnp.dot(w2_ref[...], h.astype(w2_ref.dtype),
                preferred_element_type=jnp.float32)      # (3, tn): rows (v0, v1, u)

    # SO2OutV epilogue fused: rotate (v0, v1) back by R(theta); single (3, tn) store.
    c1, s1 = cs[0:1, :], cs[L_max:L_max + 1, :]
    v0, v1 = o[0:1, :], o[1:2, :]
    out_ref[...] = jnp.concatenate(
        [v0 * c1 + v1 * s1, -v0 * s1 + v1 * c1, o[2:3, :]], axis=0)


def so2_out_heads(x_scalar, x_rot, theta, params_v, params_u, *,
                  L_max, num_rep, tn_max=1024, use_bf16=True):
    """Fused SO2OutV (rows 0..1 of the kernel output) + SO2OutU (row 2).

    Returns (u_out (N,), v_out (N, 2)); v_out is already re-rotated by R(theta).
    use_bf16=True streams activations and MXU operands in bf16 (f32 accumulation).
    """
    N, n_scalars = x_scalar.shape
    R = num_rep * L_max
    H = params_v["w1"].shape[1]
    D = n_scalars + 2 * R

    stream_dtype = jnp.bfloat16 if use_bf16 else jnp.float32
    mxu_dtype = jnp.bfloat16 if use_bf16 else jnp.float32
    h_dtype = jnp.bfloat16 if (use_bf16 and _vpu_supports_native_bf16()) else jnp.float32

    # ---- host-side packing: one feature-major (D, N) activation slab (single concat) ----
    # rows: [scalars | even(k-major, rep-minor) | odd(k-major, rep-minor)]
    # TODO(synk): ideally the upstream SO2LayerNorm emits this feature-major layout directly
    # so this transpose fuses with the normalization instead of being a separate copy pass.
    xr = x_rot.reshape(N, num_rep, L_max, 2)
    xe_T = jnp.transpose(xr[..., 0], (2, 1, 0)).reshape(R, N)     # row = k*num_rep + j
    xo_T = jnp.transpose(xr[..., 1], (2, 1, 0)).reshape(R, N)
    x_T = jnp.concatenate([x_scalar.T, xe_T, xo_T], axis=0).astype(stream_dtype)   # (D, N)

    ks = jnp.arange(1, L_max + 1, dtype=jnp.float32)
    cs_T = jnp.concatenate([jnp.cos(ks[:, None] * theta[None, :]),
                            jnp.sin(ks[:, None] * theta[None, :])], axis=0)        # (2L, N) f32

    def permute_w1(w1, b1):
        # reorder W1 rows from the interleaved [(j,k,(e,o))] layout to the packed
        # [scalar | bias | even(k,j) | odd(k,j)] layout used in the kernel scratch.
        w1s = w1[:n_scalars]
        w1r = w1[n_scalars:].reshape(num_rep, L_max, 2, H)
        w1e = jnp.transpose(w1r[:, :, 0, :], (1, 0, 2)).reshape(R, H)
        w1o = jnp.transpose(w1r[:, :, 1, :], (1, 0, 2)).reshape(R, H)
        return jnp.concatenate([w1s, b1[None, :], w1e, w1o], axis=0)          # (D+1, H)

    # stack both heads (rows [0,H)=V, [H,2H)=U) + one row producing a constant 1
    # (pre-activation 1 -> LeakyReLU 1) that carries b2 through the second matmul
    one_row = jnp.zeros((1, D + 1), jnp.float32).at[0, n_scalars].set(1.0)
    w1_all_T = jnp.concatenate([permute_w1(params_v["w1"], params_v["b1"]).T,
                                permute_w1(params_u["w1"], params_u["b1"]).T,
                                one_row], axis=0).astype(mxu_dtype)           # (2H+1, D+1)

    w2_all_T = jnp.zeros((3, 2 * H + 1), jnp.float32)
    w2_all_T = w2_all_T.at[0:2, 0:H].set(params_v["w2"].T)
    w2_all_T = w2_all_T.at[2:3, H:2 * H].set(params_u["w2"].T)
    w2_all_T = w2_all_T.at[0:2, 2 * H].set(params_v["b2"])
    w2_all_T = w2_all_T.at[2, 2 * H].set(params_u["b2"][0])
    w2_all_T = w2_all_T.astype(mxu_dtype)                                     # (3, 2H+1)

    # ---- node tiling: lane-dense tiles, >=2 tiles when N > 128 (v7x megacore),
    #      ragged last tile (no pad pass; padded-lane garbage never mixes across lanes
    #      and never reaches the first N output columns) ----
    tn = min(tn_max, _round_up(max(-(-N // 2), 1), 128))
    grid = (pl.cdiv(N, tn),)

    kernel = functools.partial(_so2_heads_kernel, n_scalars=n_scalars,
                               num_rep=num_rep, L_max=L_max, h_dtype=h_dtype)

    out_T = pl.pallas_call(
        kernel,
        out_shape=jax.ShapeDtypeStruct((3, N), jnp.float32),
        grid=grid,
        in_specs=[pl.BlockSpec((D, tn), lambda i: (0, i)),
                  pl.BlockSpec((2 * L_max, tn), lambda i: (0, i)),
                  pl.BlockSpec((2 * H + 1, D + 1), lambda i: (0, 0)),
                  pl.BlockSpec((3, 2 * H + 1), lambda i: (0, 0))],
        out_specs=pl.BlockSpec((3, tn), lambda i: (0, i)),
        scratch_shapes=[pltpu.VMEM((D + 1, tn), stream_dtype)],
        compiler_params=pltpu.CompilerParams(dimension_semantics=("parallel",)),
    )(x_T, cs_T, w1_all_T, w2_all_T)

    u_out = out_T[2, :]
    v_out = out_T[:2, :].T
    return u_out, v_out


# ----------------------------------------------------------------------------------
# Pure-JAX reference of the fused head (written directly from the SO2OutU/SO2OutV spec)
# — used only for the correctness checks in __main__.
# ----------------------------------------------------------------------------------
def _heads_reference(x_scalar, x_rot, theta, pv, pu, *, L_max, num_rep):
    N = x_scalar.shape[0]
    ks = jnp.arange(1, L_max + 1, dtype=jnp.float32)
    c = jnp.cos(theta[:, None] * ks)               # (N, L_max)
    s = jnp.sin(theta[:, None] * ks)
    xr = x_rot.reshape(N, num_rep, L_max, 2)
    ye = xr[..., 0] * c[:, None, :] - xr[..., 1] * s[:, None, :]
    yo = xr[..., 0] * s[:, None, :] + xr[..., 1] * c[:, None, :]
    y = jnp.stack([ye, yo], axis=-1).reshape(N, -1)
    x = jnp.concatenate([x_scalar, y], axis=1)
    hp = jax.lax.Precision.HIGHEST

    def mlp(p):
        h = jnp.dot(x, p["w1"], precision=hp) + p["b1"]
        h = jnp.where(h > 0, h, LEAKY_SLOPE * h)
        return jnp.dot(h, p["w2"], precision=hp) + p["b2"]

    v_mlp = mlp(pv)                                # (N, 2)
    u_out = mlp(pu)[:, 0]                          # (N,)
    c1, s1 = jnp.cos(theta), jnp.sin(theta)
    v_out = jnp.stack([v_mlp[:, 0] * c1 + v_mlp[:, 1] * s1,
                       -v_mlp[:, 0] * s1 + v_mlp[:, 1] * c1], axis=1)
    return u_out, v_out


# ----------------------------------------------------------------------------------
# Plain-JAX glue / stand-ins for undefined sub-modules
# ----------------------------------------------------------------------------------
def besel_linspace(distance, start=0.0, end=1.0, number=16, cutoff=False):
    # TODO(synk): besel_linspace definition not provided — standard Bessel/sinc radial basis.
    d = jnp.clip(distance, 1e-6, None)[:, None]
    n = jnp.arange(1, number + 1, dtype=jnp.float32)
    return jnp.sqrt(2.0 / (end - start)) * jnp.sin(n * jnp.pi * (d - start) / (end - start)) / d


def init_mlp(key, dim, hidden, n_out):
    k1, k2 = jax.random.split(key)
    return {
        "w1": jax.random.normal(k1, (dim, hidden), jnp.float32) / math.sqrt(dim),
        "b1": jnp.zeros((hidden,), jnp.float32),
        "w2": jax.random.normal(k2, (hidden, n_out), jnp.float32) / math.sqrt(hidden),
        "b2": jnp.zeros((n_out,), jnp.float32),
    }


def so2_message_passing_forward(params, u, v, boundary_norm, is_boundary, y_force,
                                pos, edge_index, *, L_max, num_rep, r_dim, n_scalars):
    N = u.shape[0]
    # ---- geometric preamble (torch.no_grad block) ----
    pos = pos - pos.mean(axis=0)
    theta = jnp.arctan2(pos[:, 1], pos[:, 0])       # get_rot: block-diag R(k*theta), k=1..L_max
    row, col = edge_index[0], edge_index[1]
    edge_vec = pos[row] - pos[col]
    distance = jnp.linalg.norm(edge_vec, axis=1)
    dist_embedding = besel_linspace(distance, 0.0, 1.0, r_dim)

    # TODO(synk): Node_embedding_vel definition not provided — deterministic linear stand-in.
    node_in = jnp.concatenate([u, is_boundary[:, None], y_force, boundary_norm], axis=1)
    x_scalar = jax.nn.leaky_relu(node_in @ params["ne_w"] + params["ne_b"], LEAKY_SLOPE)
    vecs = jnp.stack([v[:, -1, :], y_force, boundary_norm], axis=1)       # (N, 3, 2)
    x_rot = jnp.einsum("nvd,vjk->njkd", vecs, params["ne_rot"]).reshape(N, num_rep, L_max * 2)

    # TODO(synk): EqMLPBlock definition not provided — simple scalar message-passing stand-in.
    for blk in params["blocks"]:
        m = jnp.concatenate([x_scalar[row], x_scalar[col], dist_embedding], axis=1)
        m = jax.nn.leaky_relu(m @ blk["wm"] + blk["bm"], LEAKY_SLOPE)
        agg = jax.ops.segment_sum(m, row, num_segments=N)
        x_scalar = x_scalar + agg @ blk["wo"]

    # TODO(synk): SO2LayerNorm definition not provided — scalar LN + rot RMS-norm stand-in.
    mu = x_scalar.mean(axis=1, keepdims=True)
    var = x_scalar.var(axis=1, keepdims=True)
    x_scalar = (x_scalar - mu) / jnp.sqrt(var + 1e-5)
    x_rot = x_rot / jnp.sqrt(jnp.mean(x_rot ** 2, axis=(1, 2), keepdims=True) + 1e-5)

    # ---- fused Pallas head (bf16 MXU/stream path): SO2OutV (incl. re-rotation) + SO2OutU ----
    u_head, v_head = so2_out_heads(x_scalar, x_rot, theta,
                                   params["out_rot"], params["out_scalar"],
                                   L_max=L_max, num_rep=num_rep, use_bf16=True)
    return u[:, -1] + u_head, v_head + v[:, -1, :]


if __name__ == "__main__":
    # small, module-consistent shapes (multi-tile + ragged last tile for the head kernel)
    L_max, num_rep, r_dim, num_layers, n_scalars = 4, 8, 8, 2, 8
    T = 3                        # time_slize
    N, E = 200, 400              # nodes, edges

    key = jax.random.PRNGKey(0)
    keys = jax.random.split(key, 16)

    u = jax.random.normal(keys[0], (N, T), jnp.float32)
    v = jax.random.normal(keys[1], (N, T, 2), jnp.float32)
    boundary_norm = jax.random.normal(keys[2], (N, 2), jnp.float32)
    is_boundary = (jax.random.uniform(keys[3], (N,)) > 0.5).astype(jnp.float32)
    y_force = jax.random.normal(keys[4], (N, 2), jnp.float32)
    pos = jax.random.normal(keys[5], (N, 2), jnp.float32)
    edge_index = jax.random.randint(keys[6], (2, E), 0, N)

    dim = n_scalars + num_rep * L_max * 2
    blocks = []
    for i in range(num_layers):
        bk = jax.random.split(keys[7 + i], 2)
        blocks.append({
            "wm": jax.random.normal(bk[0], (2 * n_scalars + r_dim, n_scalars), jnp.float32) * 0.1,
            "bm": jnp.zeros((n_scalars,), jnp.float32),
            "wo": jax.random.normal(bk[1], (n_scalars, n_scalars), jnp.float32) * 0.1,
        })
    params = {
        "ne_w": jax.random.normal(keys[10], (T + 5, n_scalars), jnp.float32) * 0.1,
        "ne_b": jnp.zeros((n_scalars,), jnp.float32),
        "ne_rot": jax.random.normal(keys[11], (3, num_rep, L_max), jnp.float32) * 0.1,
        "blocks": blocks,
        "out_rot": init_mlp(keys[12], dim, 3 * dim, 2),       # SO2OutV mlp
        "out_scalar": init_mlp(keys[13], dim, 3 * dim, 1),    # SO2OutU mlp (n_outputs=1)
    }

    # full forward pass (bf16 head path)
    u_new, v_new = so2_message_passing_forward(
        params, u, v, boundary_norm, is_boundary, y_force, pos, edge_index,
        L_max=L_max, num_rep=num_rep, r_dim=r_dim, n_scalars=n_scalars)
    jax.block_until_ready((u_new, v_new))
    assert u_new.shape == (N,)
    assert v_new.shape == (N, 2)
    assert bool(jnp.all(jnp.isfinite(u_new))) and bool(jnp.all(jnp.isfinite(v_new)))

    # direct correctness checks of the fused Pallas head against the spec formulation
    xk = jax.random.split(keys[14], 3)
    xs_t = jax.random.normal(xk[0], (N, n_scalars), jnp.float32)
    xr_t = jax.random.normal(xk[1], (N, num_rep, L_max * 2), jnp.float32)
    th_t = jax.random.uniform(xk[2], (N,), jnp.float32, -math.pi, math.pi)
    u_r, v_r = _heads_reference(xs_t, xr_t, th_t, params["out_rot"], params["out_scalar"],
                                L_max=L_max, num_rep=num_rep)

    # (1) f32 kernel path: tight tolerance validates layout / permutation / bias-fold /
    #     de-rotation / epilogue structure exactly.
    u_k32, v_k32 = so2_out_heads(xs_t, xr_t, th_t, params["out_rot"], params["out_scalar"],
                                 L_max=L_max, num_rep=num_rep, use_bf16=False)
    jax.block_until_ready((u_k32, v_k32))
    assert bool(jnp.allclose(u_k32, u_r, atol=2e-3, rtol=2e-3))
    assert bool(jnp.allclose(v_k32, v_r, atol=2e-3, rtol=2e-3))

    # (2) bf16 production path: tolerance set by bf16 operand quantization only
    #     (structure already validated by the f32 check above).
    u_k16, v_k16 = so2_out_heads(xs_t, xr_t, th_t, params["out_rot"], params["out_scalar"],
                                 L_max=L_max, num_rep=num_rep, use_bf16=True)
    jax.block_until_ready((u_k16, v_k16))
    assert bool(jnp.allclose(u_k16, u_r, atol=5e-2, rtol=5e-2))
    assert bool(jnp.allclose(v_k16, v_r, atol=5e-2, rtol=5e-2))

    print("KERNEL_OK")
</pallas_src>

<mosaic_0001>
module attributes {stable_mosaic.version = 11 : i64} {
  func.func @_so2_heads_kernel(%arg0: i32, %arg1: memref<72x128xbf16, #tpu.memory_space<vmem>>, %arg2: memref<8x128xf32, #tpu.memory_space<vmem>>, %arg3: memref<433x73xbf16, #tpu.memory_space<vmem>>, %arg4: memref<3x433xbf16, #tpu.memory_space<vmem>>, %arg5: memref<3x128xf32, #tpu.memory_space<vmem>>, %arg6: memref<73x128xbf16, #tpu.memory_space<vmem>>) attributes {dimension_semantics = [#tpu.dimension_semantics<parallel>], iteration_bounds = array<i64: 2>, scalar_prefetch = 0 : i64, scratch_operands = 1 : i64, tpu.core_type = #tpu.core_type<tc>, window_params = [{transform_indices = @transform_0, window_bounds = array<i64: 72, 128>}, {transform_indices = @transform_1, window_bounds = array<i64: 8, 128>}, {pipeline_mode = #tpu.pipeline_mode<synchronous>, transform_indices = @transform_2, window_bounds = array<i64: 433, 73>}, {pipeline_mode = #tpu.pipeline_mode<synchronous>, transform_indices = @transform_3, window_bounds = array<i64: 3, 433>}, {transform_indices = @transform_4, window_bounds = array<i64: 3, 128>}]} {
    %c0 = arith.constant 0 : index
    %c0_0 = arith.constant 0 : index
    %0 = vector.load %arg2[%c0, %c0_0] : memref<8x128xf32, #tpu.memory_space<vmem>>, vector<8x128xf32>
    %c0_1 = arith.constant 0 : index
    %c0_2 = arith.constant 0 : index
    %1 = vector.load %arg1[%c0_1, %c0_2] : memref<72x128xbf16, #tpu.memory_space<vmem>>, vector<8x128xbf16>
    %c0_3 = arith.constant 0 : index
    %c0_4 = arith.constant 0 : index
    %2 = vector.load %arg6[%c0_3, %c0_4] : memref<73x128xbf16, #tpu.memory_space<vmem>>, vector<8x128xbf16>
    tpu.vector_store %arg6[%c0_3, %c0_4], %1 {strides = array<i32>} : memref<73x128xbf16, #tpu.memory_space<vmem>>, vector<8x128xbf16>,
    %cst = arith.constant 1.000000e+00 : bf16
    %3 = vector.broadcast %cst : bf16 to vector<1x128xbf16>
    %c8 = arith.constant 8 : index
    %c0_5 = arith.constant 0 : index
    %4 = vector.load %arg6[%c8, %c0_5] : memref<73x128xbf16, #tpu.memory_space<vmem>>, vector<1x128xbf16>
    tpu.vector_store %arg6[%c8, %c0_5], %3 {strides = array<i32>} : memref<73x128xbf16, #tpu.memory_space<vmem>>, vector<1x128xbf16>,
    %5 = vector.extract_strided_slice %0 {offsets = [0, 0], sizes = [1, 128], strides = [1, 1]} : vector<8x128xf32> to vector<1x128xf32>
    %6 = vector.extract_strided_slice %0 {offsets = [4, 0], sizes = [1, 128], strides = [1, 1]} : vector<8x128xf32> to vector<1x128xf32>
    %c8_6 = arith.constant 8 : index
    %c0_7 = arith.constant 0 : index
    %7 = vector.load %arg1[%c8_6, %c0_7] : memref<72x128xbf16, #tpu.memory_space<vmem>>, vector<8x128xbf16>
    %8 = arith.extf %7 : vector<8x128xbf16> to vector<8x128xf32>
    %c40 = arith.constant 40 : index
    %c0_8 = arith.constant 0 : index
    %9 = vector.load %arg1[%c40, %c0_8] : memref<72x128xbf16, #tpu.memory_space<vmem>>, vector<8x128xbf16>
    %10 = arith.extf %9 : vector<8x128xbf16> to vector<8x128xf32>
    %11 = vector.broadcast %5 : vector<1x128xf32> to vector<8x128xf32>
    %12 = arith.mulf %8, %11 : vector<8x128xf32>
    %13 = vector.broadcast %6 : vector<1x128xf32> to vector<8x128xf32>
    %14 = arith.mulf %10, %13 : vector<8x128xf32>
    %15 = arith.subf %12, %14 : vector<8x128xf32>
    %16 = arith.truncf %15 : vector<8x128xf32> to vector<8x128xbf16>
    %c9 = arith.constant 9 : index
    %c0_9 = arith.constant 0 : index
    %17 = vector.load %arg6[%c9, %c0_9] : memref<73x128xbf16, #tpu.memory_space<vmem>>, vector<8x128xbf16>
    tpu.vector_store %arg6[%c9, %c0_9], %16 {strides = array<i32>} : memref<73x128xbf16, #tpu.memory_space<vmem>>, vector<8x128xbf16>,
    %18 = vector.broadcast %6 : vector<1x128xf32> to vector<8x128xf32>
    %19 = arith.mulf %8, %18 : vector<8x128xf32>
    %20 = vector.broadcast %5 : vector<1x128xf32> to vector<8x128xf32>
    %21 = arith.mulf %10, %20 : vector<8x128xf32>
    %22 = arith.addf %19, %21 : vector<8x128xf32>
    %23 = arith.truncf %22 : vector<8x128xf32> to vector<8x128xbf16>
    %c41 = arith.constant 41 : index
    %c0_10 = arith.constant 0 : index
    %24 = vector.load %arg6[%c41, %c0_10] : memref<73x128xbf16, #tpu.memory_space<vmem>>, vector<8x128xbf16>
    tpu.vector_store %arg6[%c41, %c0_10], %23 {strides = array<i32>} : memref<73x128xbf16, #tpu.memory_space<vmem>>, vector<8x128xbf16>,
    %25 = vector.extract_strided_slice %0 {offsets = [1, 0], sizes = [1, 128], strides = [1, 1]} : vector<8x128xf32> to vector<1x128xf32>
    %26 = vector.extract_strided_slice %0 {offsets = [5, 0], sizes = [1, 128], strides = [1, 1]} : vector<8x128xf32> to vector<1x128xf32>
    %c16 = arith.constant 16 : index
    %c0_11 = arith.constant 0 : index
    %27 = vector.load %arg1[%c16, %c0_11] : memref<72x128xbf16, #tpu.memory_space<vmem>>, vector<8x128xbf16>
    %28 = arith.extf %27 : vector<8x128xbf16> to vector<8x128xf32>
    %c48 = arith.constant 48 : index
    %c0_12 = arith.constant 0 : index
    %29 = vector.load %arg1[%c48, %c0_12] : memref<72x128xbf16, #tpu.memory_space<vmem>>, vector<8x128xbf16>
    %30 = arith.extf %29 : vector<8x128xbf16> to vector<8x128xf32>
    %31 = vector.broadcast %25 : vector<1x128xf32> to vector<8x128xf32>
    %32 = arith.mulf %28, %31 : vector<8x128xf32>
    %33 = vector.broadcast %26 : vector<1x128xf32> to vector<8x128xf32>
    %34 = arith.mulf %30, %33 : vector<8x128xf32>
    %35 = arith.subf %32, %34 : vector<8x128xf32>
    %36 = arith.truncf %35 : vector<8x128xf32> to vector<8x128xbf16>
    %c17 = arith.constant 17 : index
    %c0_13 = arith.constant 0 : index
    %37 = vector.load %arg6[%c17, %c0_13] : memref<73x128xbf16, #tpu.memory_space<vmem>>, vector<8x128xbf16>
    tpu.vector_store %arg6[%c17, %c0_13], %36 {strides = array<i32>} : memref<73x128xbf16, #tpu.memory_space<vmem>>, vector<8x128xbf16>,
    %38 = vector.broadcast %26 : vector<1x128xf32> to vector<8x128xf32>
    %39 = arith.mulf %28, %38 : vector<8x128xf32>
    %40 = vector.broadcast %25 : vector<1x128xf32> to vector<8x128xf32>
    %41 = arith.mulf %30, %40 : vector<8x128xf32>
    %42 = arith.addf %39, %41 : vector<8x128xf32>
    %43 = arith.truncf %42 : vector<8x128xf32> to vector<8x128xbf16>
    %c49 = arith.constant 49 : index
    %c0_14 = arith.constant 0 : index
    %44 = vector.load %arg6[%c49, %c0_14] : memref<73x128xbf16, #tpu.memory_space<vmem>>, vector<8x128xbf16>
    tpu.vector_store %arg6[%c49, %c0_14], %43 {strides = array<i32>} : memref<73x128xbf16, #tpu.memory_space<vmem>>, vector<8x128xbf16>,
    %45 = vector.extract_strided_slice %0 {offsets = [2, 0], sizes = [1, 128], strides = [1, 1]} : vector<8x128xf32> to vector<1x128xf32>
    %46 = vector.extract_strided_slice %0 {offsets = [6, 0], sizes = [1, 128], strides = [1, 1]} : vector<8x128xf32> to vector<1x128xf32>
    %c24 = arith.constant 24 : index
    %c0_15 = arith.constant 0 : index
    %47 = vector.load %arg1[%c24, %c0_15] : memref<72x128xbf16, #tpu.memory_space<vmem>>, vector<8x128xbf16>
    %48 = arith.extf %47 : vector<8x128xbf16> to vector<8x128xf32>
    %c56 = arith.constant 56 : index
    %c0_16 = arith.constant 0 : index
    %49 = vector.load %arg1[%c56, %c0_16] : memref<72x128xbf16, #tpu.memory_space<vmem>>, vector<8x128xbf16>
    %50 = arith.extf %49 : vector<8x128xbf16> to vector<8x128xf32>
    %51 = vector.broadcast %45 : vector<1x128xf32> to vector<8x128xf32>
    %52 = arith.mulf %48, %51 : vector<8x128xf32>
    %53 = vector.broadcast %46 : vector<1x128xf32> to vector<8x128xf32>
    %54 = arith.mulf %50, %53 : vector<8x128xf32>
    %55 = arith.subf %52, %54 : vector<8x128xf32>
    %56 = arith.truncf %55 : vector<8x128xf32> to vector<8x128xbf16>
    %c25 = arith.constant 25 : index
    %c0_17 = arith.constant 0 : index
    %57 = vector.load %arg6[%c25, %c0_17] : memref<73x128xbf16, #tpu.memory_space<vmem>>, vector<8x128xbf16>
    tpu.vector_store %arg6[%c25, %c0_17], %56 {strides = array<i32>} : memref<73x128xbf16, #tpu.memory_space<vmem>>, vector<8x128xbf16>,
    %58 = vector.broadcast %46 : vector<1x128xf32> to vector<8x128xf32>
    %59 = arith.mulf %48, %58 : vector<8x128xf32>
    %60 = vector.broadcast %45 : vector<1x128xf32> to vector<8x128xf32>
    %61 = arith.mulf %50, %60 : vector<8x128xf32>
    %62 = arith.addf %59, %61 : vector<8x128xf32>
    %63 = arith.truncf %62 : vector<8x128xf32> to vector<8x128xbf16>
    %c57 = arith.constant 57 : index
    %c0_18 = arith.constant 0 : index
    %64 = vector.load %arg6[%c57, %c0_18] : memref<73x128xbf16, #tpu.memory_space<vmem>>, vector<8x128xbf16>
    tpu.vector_store %arg6[%c57, %c0_18], %63 {strides = array<i32>} : memref<73x128xbf16, #tpu.memory_space<vmem>>, vector<8x128xbf16>,
    %65 = vector.extract_strided_slice %0 {offsets = [3, 0], sizes = [1, 128], strides = [1, 1]} : vector<8x128xf32> to vector<1x128xf32>
    %66 = vector.extract_strided_slice %0 {offsets = [7, 0], sizes = [1, 128], strides = [1, 1]} : vector<8x128xf32> to vector<1x128xf32>
    %c32 = arith.constant 32 : index
    %c0_19 = arith.constant 0 : index
    %67 = vector.load %arg1[%c32, %c0_19] : memref<72x128xbf16, #tpu.memory_space<vmem>>, vector<8x128xbf16>
    %68 = arith.extf %67 : vector<8x128xbf16> to vector<8x128xf32>
    %c64 = arith.constant 64 : index
    %c0_20 = arith.constant 0 : index
    %69 = vector.load %arg1[%c64, %c0_20] : memref<72x128xbf16, #tpu.memory_space<vmem>>, vector<8x128xbf16>
    %70 = arith.extf %69 : vector<8x128xbf16> to vector<8x128xf32>
    %71 = vector.broadcast %65 : vector<1x128xf32> to vector<8x128xf32>
    %72 = arith.mulf %68, %71 : vector<8x128xf32>
    %73 = vector.broadcast %66 : vector<1x128xf32> to vector<8x128xf32>
    %74 = arith.mulf %70, %73 : vector<8x128xf32>
    %75 = arith.subf %72, %74 : vector<8x128xf32>
    %76 = arith.truncf %75 : vector<8x128xf32> to vector<8x128xbf16>
    %c33 = arith.constant 33 : index
    %c0_21 = arith.constant 0 : index
    %77 = vector.load %arg6[%c33, %c0_21] : memref<73x128xbf16, #tpu.memory_space<vmem>>, vector<8x128xbf16>
    tpu.vector_store %arg6[%c33, %c0_21], %76 {strides = array<i32>} : memref<73x128xbf16, #tpu.memory_space<vmem>>, vector<8x128xbf16>,
    %78 = vector.broadcast %66 : vector<1x128xf32> to vector<8x128xf32>
    %79 = arith.mulf %68, %78 : vector<8x128xf32>
    %80 = vector.broadcast %65 : vector<1x128xf32> to vector<8x128xf32>
    %81 = arith.mulf %70, %80 : vector<8x128xf32>
    %82 = arith.addf %79, %81 : vector<8x128xf32>
    %83 = arith.truncf %82 : vector<8x128xf32> to vector<8x128xbf16>
    %c65 = arith.constant 65 : index
    %c0_22 = arith.constant 0 : index
    %84 = vector.load %arg6[%c65, %c0_22] : memref<73x128xbf16, #tpu.memory_space<vmem>>, vector<8x128xbf16>
    tpu.vector_store %arg6[%c65, %c0_22], %83 {strides = array<i32>} : memref<73x128xbf16, #tpu.memory_space<vmem>>, vector<8x128xbf16>,
    %c0_23 = arith.constant 0 : index
    %c0_24 = arith.constant 0 : index
    %85 = vector.load %arg3[%c0_23, %c0_24] : memref<433x73xbf16, #tpu.memory_space<vmem>>, vector<433x73xbf16>
    %c0_25 = arith.constant 0 : index
    %c0_26 = arith.constant 0 : index
    %86 = vector.load %arg6[%c0_25, %c0_26] : memref<73x128xbf16, #tpu.memory_space<vmem>>, vector<73x128xbf16>
    %cst_27 = arith.constant dense<0.000000e+00> : vector<433x128xf32>
    %87 = tpu.matmul %85, %86, %cst_27 {dimension_numbers = #tpu.dot_dimension_numbers<[1], [0], [0], [1], [0, 0, 1, 1], [], []>} : vector<433x73xbf16>, vector<73x128xbf16>, vector<433x128xf32> -> vector<433x128xf32>
    %88 = arith.truncf %87 : vector<433x128xf32> to vector<433x128xbf16>
    %cst_28 = arith.constant 1.000980e-02 : bf16
    %89 = vector.broadcast %cst_28 : bf16 to vector<433x128xbf16>
    %90 = arith.mulf %89, %88 : vector<433x128xbf16>
    %91 = arith.maximumf %88, %90 : vector<433x128xbf16>
    %c0_29 = arith.constant 0 : index
    %c0_30 = arith.constant 0 : index
    %92 = vector.load %arg4[%c0_29, %c0_30] : memref<3x433xbf16, #tpu.memory_space<vmem>>, vector<3x433xbf16>
    %cst_31 = arith.constant dense<0.000000e+00> : vector<3x128xf32>
    %93 = tpu.matmul %92, %91, %cst_31 {dimension_numbers = #tpu.dot_dimension_numbers<[1], [0], [0], [1], [0, 0, 1, 1], [], []>} : vector<3x433xbf16>, vector<433x128xbf16>, vector<3x128xf32> -> vector<3x128xf32>
    %94 = vector.extract_strided_slice %0 {offsets = [0, 0], sizes = [1, 128], strides = [1, 1]} : vector<8x128xf32> to vector<1x128xf32>
    %95 = vector.extract_strided_slice %0 {offsets = [4, 0], sizes = [1, 128], strides = [1, 1]} : vector<8x128xf32> to vector<1x128xf32>
    %96 = vector.extract_strided_slice %93 {offsets = [0, 0], sizes = [1, 128], strides = [1, 1]} : vector<3x128xf32> to vector<1x128xf32>
    %97 = vector.extract_strided_slice %93 {offsets = [1, 0], sizes = [1, 128], strides = [1, 1]} : vector<3x128xf32> to vector<1x128xf32>
    %98 = arith.mulf %96, %94 : vector<1x128xf32>
    %99 = arith.mulf %97, %95 : vector<1x128xf32>
    %100 = arith.addf %98, %99 : vector<1x128xf32>
    %cst_32 = arith.constant 0.000000e+00 : f32
    %101 = vector.broadcast %cst_32 : f32 to vector<1x128xf32>
    %102 = arith.subf %101, %96 : vector<1x128xf32>
    %103 = arith.mulf %102, %95 : vector<1x128xf32>
    %104 = arith.mulf %97, %94 : vector<1x128xf32>
    %105 = arith.addf %103, %104 : vector<1x128xf32>
    %106 = vector.extract_strided_slice %93 {offsets = [2, 0], sizes = [1, 128], strides = [1, 1]} : vector<3x128xf32> to vector<1x128xf32>
    %107 = tpu.concatenate %100, %105, %106 in 0 : vector<1x128xf32>, vector<1x128xf32>, vector<1x128xf32> -> vector<3x128xf32>
    %c0_33 = arith.constant 0 : index
    %c0_34 = arith.constant 0 : index
    %108 = vector.load %arg5[%c0_33, %c0_34] : memref<3x128xf32, #tpu.memory_space<vmem>>, vector<3x128xf32>
    tpu.vector_store %arg5[%c0_33, %c0_34], %107 {strides = array<i32>} : memref<3x128xf32, #tpu.memory_space<vmem>>, vector<3x128xf32>,
    return
  }
  func.func @transform_0(%arg0: i32) -> (i32, i32) {
    %c0_i32 = arith.constant 0 : i32
    %c0_i32_0 = arith.constant 0 : i32
    return %c0_i32, %arg0 : i32, i32
  }
  func.func @transform_1(%arg0: i32) -> (i32, i32) {
    %c0_i32 = arith.constant 0 : i32
    %c0_i32_0 = arith.constant 0 : i32
    return %c0_i32, %arg0 : i32, i32
  }
  func.func @transform_2(%arg0: i32) -> (i32, i32) {
    %c0_i32 = arith.constant 0 : i32
    %c0_i32_0 = arith.constant 0 : i32
    %c0_i32_1 = arith.constant 0 : i32
    return %c0_i32, %c0_i32_0 : i32, i32
  }
  func.func @transform_3(%arg0: i32) -> (i32, i32) {
    %c0_i32 = arith.constant 0 : i32
    %c0_i32_0 = arith.constant 0 : i32
    %c0_i32_1 = arith.constant 0 : i32
    return %c0_i32, %c0_i32_0 : i32, i32
  }
  func.func @transform_4(%arg0: i32) -> (i32, i32) {
    %c0_i32 = arith.constant 0 : i32
    %c0_i32_0 = arith.constant 0 : i32
    return %c0_i32, %arg0 : i32, i32
  }
}

</mosaic_0001>

<llo_original>
// kernel: tpu_custom_call.1
$region0: #{tpu_custom_call.1}
  #allocation0 [shape = 'u32[]', space=smem, size = 0x4, offset = 0x4, fixed_abs, tag = 'smem constant byte address 0x4 - core index']
  #allocation1 [shape = 'u32[72,128]{1,0:T(1,128)}', space=vmem, size = 0x9000, scoped, tag = 'internal scratch']
  #allocation2 [shape = 'bf16[73,128]{1,0:T(8,128)(2,1)}', space=vmem, size = 0x5000, scoped, tag = 'scratch operand']
  %s0 = inlined_call_operand.vmem [shape: bf16[72,200], index: 0, kind: input, shape index: {}]
  %s1 = inlined_call_operand.vmem [shape: f32[8,200], index: 1, kind: input, shape index: {}]
  %s2 = inlined_call_operand.vmem [shape: bf16[433,73], index: 2, kind: input, shape index: {}]
  %s3 = inlined_call_operand.vmem [shape: bf16[3,433], index: 3, kind: input, shape index: {}]
  %s4 = inlined_call_operand.hbm [shape: f32[3,200], index: 4, kind: output, shape index: {}]
  %s5 = sld [smem:[#allocation0]]
  $region90: #{tpu_custom_call.1} parent=0
    _
  %s7 = ssub.s32 1, %s5
  %s8 = scalar_select 0, %s7, %s5
  $region1: #{tpu_custom_call.1} parent=0
    #allocation3 [shape = 'u8[36864]{0}', space=vmem, size = 0x9000, scoped, tag = 'input window, operand 0']
    #allocation4 [shape = 'u8[4096]{0}', space=vmem, size = 0x1000, scoped, tag = 'output window, operand 0']
    #allocation5 [shape = 's32[2]{0}', space=sflag, size = 0x8, scoped, tag = 'scoped memory for tpu_custom_call.1']
    %9 = vsyncpa [#allocation5], 0
    %s10 = scalar_lea.sflag [#allocation5], 1
    %11 = vsyncpa %s10, 0
    loop: start=0, step=1, limit=4
    $region2: #{tpu_custom_call.1} parent=1 // loop_pre_header
      _
    $region3: #{tpu_custom_call.1} parent=1 // loop_header
      %s13 = sphi 0, %s17
      %p14 = scmp.ge.s32.totalorder %s13, 4
      %s23 = sphi 0, %s25
      %s26 = sphi 0, %s23
      %s27 = sphi 0, %s26
      %s43 = sphi 0, %s27
      %s49 = sphi 0, %s51
      %s52 = sphi 0, %s49
      %s53 = sphi 0, %s52
      %s69 = sphi 0, %s53
      %s73 = sphi 0, %s73
      %s75 = sphi 0, %s73
      %s76 = sphi 0, %s75
      %s90 = sphi 0, %s76
      %s94 = sphi 0, %s94
      %s96 = sphi 0, %s94
      %s97 = sphi 0, %s96
      %s111 = sphi 0, %s97
      %s117 = sphi 0, %s119
      %s120 = sphi 0, %s117
      %s121 = sphi 0, %s120
      %s137 = sphi 0, %s121
    $region4: #{tpu_custom_call.1} parent=1 // loop_header_branch
      %16 = sbr.rel (%p14) target = $region8
    $region5: #{tpu_custom_call.1} parent=1 // loop_body
      %s18 = ssub.s32 %s13, 1
      %s19 = ssub.s32 %s13, 2
      %s20 = sadd.s32 %s13, 1
      %s21 = ssub.s32 %s13, %s20
      %p22 = scmp.eq.s32.totalorder %s21, 0
      %s24 = sadd.s32 %s23, 1
      %s25 = scalar_select %p22, %s23, %s24
      %p28 = pneg %p22
      %p29 = scmp.eq.s32.totalorder %s13, 1
      %p30 = por %p28, %p29
      %p31 = scmp.ne.s32.totalorder %s23, %s26
      %p32 = scmp.eq.s32.totalorder %s13, 0
      %p33 = por %p31, %p32
      %p34 = scmp.ne.s32.totalorder %s23, %s26
      %p35 = scmp.eq.s32.totalorder %s18, 1
      %p36 = por %p34, %p35
      %p37 = scmp.ne.s32.totalorder %s26, %s27
      %p38 = scmp.eq.s32.totalorder %s18, 0
      %p39 = por %p37, %p38
      %p40 = scmp.ne.s32.totalorder %s26, %s27
      %p41 = scmp.eq.s32.totalorder %s19, 1
      %p42 = por %p40, %p41
      %p44 = scmp.ne.s32.totalorder %s27, %s43
      %p45 = scmp.eq.s32.totalorder %s19, 0
      %p46 = por %p44, %p45
      %s47 = ssub.s32 %s13, %s20
      %p48 = scmp.eq.s32.totalorder %s47, 0
      %s50 = sadd.s32 %s49, 1
      %s51 = scalar_select %p48, %s49, %s50
      %p54 = pneg %p48
      %p55 = scmp.eq.s32.totalorder %s13, 1
      %p56 = por %p54, %p55
      %p57 = scmp.ne.s32.totalorder %s49, %s52
      %p58 = scmp.eq.s32.totalorder %s13, 0
      %p59 = por %p57, %p58
      %p60 = scmp.ne.s32.totalorder %s49, %s52
      %p61 = scmp.eq.s32.totalorder %s18, 1
      %p62 = por %p60, %p61
      %p63 = scmp.ne.s32.totalorder %s52, %s53
      %p64 = scmp.eq.s32.totalorder %s18, 0
      %p65 = por %p63, %p64
      %p66 = scmp.ne.s32.totalorder %s52, %s53
      %p67 = scmp.eq.s32.totalorder %s19, 1
      %p68 = por %p66, %p67
      %p70 = scmp.ne.s32.totalorder %s53, %s69
      %p71 = scmp.eq.s32.totalorder %s19, 0
      %p72 = por %p70, %p71
      %s74 = sadd.s32 %s73, 1
      %p77 = scmp.eq.s32.totalorder %s13, 1
      %p78 = scmp.ne.s32.totalorder %s73, %s75
      %p79 = scmp.eq.s32.totalorder %s13, 0
      %p80 = por %p78, %p79
      %p81 = scmp.ne.s32.totalorder %s73, %s75
      %p82 = scmp.eq.s32.totalorder %s18, 1
      %p83 = por %p81, %p82
      %p84 = scmp.ne.s32.totalorder %s75, %s76
      %p85 = scmp.eq.s32.totalorder %s18, 0
      %p86 = por %p84, %p85
      %p87 = scmp.ne.s32.totalorder %s75, %s76
      %p88 = scmp.eq.s32.totalorder %s19, 1
      %p89 = por %p87, %p88
      %p91 = scmp.ne.s32.totalorder %s76, %s90
      %p92 = scmp.eq.s32.totalorder %s19, 0
      %p93 = por %p91, %p92
      %s95 = sadd.s32 %s94, 1
      %p98 = scmp.eq.s32.totalorder %s13, 1
      %p99 = scmp.ne.s32.totalorder %s94, %s96
      %p100 = scmp.eq.s32.totalorder %s13, 0
      %p101 = por %p99, %p100
      %p102 = scmp.ne.s32.totalorder %s94, %s96
      %p103 = scmp.eq.s32.totalorder %s18, 1
      %p104 = por %p102, %p103
      %p105 = scmp.ne.s32.totalorder %s96, %s97
      %p106 = scmp.eq.s32.totalorder %s18, 0
      %p107 = por %p105, %p106
      %p108 = scmp.ne.s32.totalorder %s96, %s97
      %p109 = scmp.eq.s32.totalorder %s19, 1
      %p110 = por %p108, %p109
      %p112 = scmp.ne.s32.totalorder %s97, %s111
      %p113 = scmp.eq.s32.totalorder %s19, 0
      %p114 = por %p112, %p113
      %s115 = ssub.s32 %s13, %s20
      %p116 = scmp.eq.s32.totalorder %s115, 0
      %s118 = sadd.s32 %s117, 1
      %s119 = scalar_select %p116, %s117, %s118
      %p122 = pneg %p116
      %p123 = scmp.eq.s32.totalorder %s13, 1
      %p124 = por %p122, %p123
      %p125 = scmp.ne.s32.totalorder %s117, %s120
      %p126 = scmp.eq.s32.totalorder %s13, 0
      %p127 = por %p125, %p126
      %p128 = scmp.ne.s32.totalorder %s117, %s120
      %p129 = scmp.eq.s32.totalorder %s18, 1
      %p130 = por %p128, %p129
      %p131 = scmp.ne.s32.totalorder %s120, %s121
      %p132 = scmp.eq.s32.totalorder %s18, 0
      %p133 = por %p131, %p132
      %p134 = scmp.ne.s32.totalorder %s120, %s121
      %p135 = scmp.eq.s32.totalorder %s19, 1
      %p136 = por %p134, %p135
      %p138 = scmp.ne.s32.totalorder %s121, %s137
      %p139 = scmp.eq.s32.totalorder %s19, 0
      %p140 = por %p138, %p139
      %p141 = scmp.le.s32.totalorder 1, %s13
      %p142 = scmp.lt.s32.totalorder %s13, 3
      %p143 = pnand %p141, %p142
      %p144 = pneg %p143
      // Predicated region
      $region9: #{tpu_custom_call.1} parent=5 // pred_check
        _
      $region10: #{tpu_custom_call.1} parent=5 // pred_check_branch
        %146 = sbr.rel (%p143) target = $region12
      $region11: #{tpu_custom_call.1} parent=5 // pred_region
        %s147 = ssub.s32 %s13, 1
        // Predicated region
        $region13: #{tpu_custom_call.1} parent=11 // pred_check
          %p148 = pneg %p86
        $region14: #{tpu_custom_call.1} parent=11 // pred_check_branch
          %150 = sbr.rel (%p148) target = $region16
        $region15: #{tpu_custom_call.1} parent=11 // pred_region
          _
        $region16: #{tpu_custom_call.1} parent=11 // pred_fallthru
          _
        // Predicated region
        $region17: #{tpu_custom_call.1} parent=11 // pred_check
          %p151 = pneg %p107
        $region18: #{tpu_custom_call.1} parent=11 // pred_check_branch
          %153 = sbr.rel (%p151) target = $region20
        $region19: #{tpu_custom_call.1} parent=11 // pred_region
          _
        $region20: #{tpu_custom_call.1} parent=11 // pred_fallthru
          _
      $region12: #{tpu_custom_call.1} parent=5 // pred_fallthru
        _
      %p154 = scmp.lt.s32.totalorder %s13, 2
      // Predicated region
      $region21: #{tpu_custom_call.1} parent=5 // pred_check
        %p155 = pneg %p154
      $region22: #{tpu_custom_call.1} parent=5 // pred_check_branch
        %157 = sbr.rel (%p155) target = $region24
      $region23: #{tpu_custom_call.1} parent=5 // pred_region
        // Predicated region
        $region25: #{tpu_custom_call.1} parent=23 // pred_check
          %p158 = pneg %p33
        $region26: #{tpu_custom_call.1} parent=23 // pred_check_branch
          %160 = sbr.rel (%p158) target = $region28
        $region27: #{tpu_custom_call.1} parent=23 // pred_region
          %s161 = sand.u32 %s23, 1
          %s162 = sand.u32 %s23, 1
          %s163 = smul.addr %s162, 36
          %s164 = scalar_lea.vmem [#allocation3], %s163
          %s165 = smul.addr %s13, 4
          %s166 = scalar_lea.vmem %s0, %s165
          // Predicated region
          $region29: #{tpu_custom_call.1} parent=27 // pred_check
            _
          $region30: #{tpu_custom_call.1} parent=27 // pred_check_branch
            %168 = sbr.rel (0) target = $region32
          $region31: #{tpu_custom_call.1} parent=27 // pred_region
            // Predicated region
            $region33: #{tpu_custom_call.1} parent=31 // pred_check
              _
            $region34: #{tpu_custom_call.1} parent=31 // pred_check_branch
              %170 = sbr.rel target = $region36
            $region35: #{tpu_custom_call.1} parent=31 // pred_region
              // Predicated region
              $region48: #{tpu_custom_call.1} parent=35 // pred_check
                _
              $region49: #{tpu_custom_call.1} parent=35 // pred_check_branch
                %202 = sbr.rel (0) target = $region51
              $region50: #{tpu_custom_call.1} parent=35 // pred_region
                loop: start=0, step=1, limit=1
                $region52: #{tpu_custom_call.1} parent=50 // loop_pre_header
                  _
                $region53: #{tpu_custom_call.1} parent=50 // loop_header
                  %s204 = sphi 0, %s208
                  %p205 = scmp.ge.s32.totalorder %s204, 1
                  %s209 = sphi %s166, %s166
                  %s210 = sphi %s164, %s164
                $region54: #{tpu_custom_call.1} parent=50 // loop_header_branch
                  %207 = sbr.rel (%p205) target = $region58
                $region55: #{tpu_custom_call.1} parent=50 // loop_body
                  _
                $region56: #{tpu_custom_call.1} parent=50 // loop_footer
                  %s208 = sadd.s32 1, %s204
                $region57: #{tpu_custom_call.1} parent=50 // loop_footer_branch
                  %203 = sbr.rel target = $region53
                $region58: #{tpu_custom_call.1} parent=50 // loop_exit
                  _
                %s212 = ssub.s32 16, 1
                loop: start=0, step=1, limit=1
                $region59: #{tpu_custom_call.1} parent=50 // loop_pre_header
                  _
                $region60: #{tpu_custom_call.1} parent=50 // loop_header
                  %s214 = sphi 0, %s218
                  %p215 = scmp.ge.s32.totalorder %s214, 1
                  %s219 = sphi %s166, %s166
                  %s220 = sphi %s164, %s164
                $region61: #{tpu_custom_call.1} parent=50 // loop_header_branch
                  %217 = sbr.rel (%p215) target = $region65
                $region62: #{tpu_custom_call.1} parent=50 // loop_body
                  %v221 = vld [vmem:[%s219] sm:%s212]
                  %222 = vst [vmem:[%s220] sm:%s212] %v221
                  %v223 = vld [vmem:[%s219 + $0x8] sm:%s212]
                  %224 = vst [vmem:[%s220 + $0x4] sm:%s212] %v223
                  %v225 = vld [vmem:[%s219 + $0x10] sm:%s212]
                  %226 = vst [vmem:[%s220 + $0x8] sm:%s212] %v225
                  %v227 = vld [vmem:[%s219 + $0x18] sm:%s212]
                  %228 = vst [vmem:[%s220 + $0xc] sm:%s212] %v227
                  %v229 = vld [vmem:[%s219 + $0x20] sm:%s212]
                  %230 = vst [vmem:[%s220 + $0x10] sm:%s212] %v229
                  %v231 = vld [vmem:[%s219 + $0x28] sm:%s212]
                  %232 = vst [vmem:[%s220 + $0x14] sm:%s212] %v231
                  %v233 = vld [vmem:[%s219 + $0x30] sm:%s212]
                  %234 = vst [vmem:[%s220 + $0x18] sm:%s212] %v233
                  %v235 = vld [vmem:[%s219 + $0x38] sm:%s212]
                  %236 = vst [vmem:[%s220 + $0x1c] sm:%s212] %v235
                  %v237 = vld [vmem:[%s219 + $0x40] sm:%s212]
                  %238 = vst [vmem:[%s220 + $0x20] sm:%s212] %v237
                $region63: #{tpu_custom_call.1} parent=50 // loop_footer
                  %s218 = sadd.s32 1, %s214
                $region64: #{tpu_custom_call.1} parent=50 // loop_footer_branch
                  %213 = sbr.rel target = $region60
                $region65: #{tpu_custom_call.1} parent=50 // loop_exit
                  _
              $region51: #{tpu_custom_call.1} parent=35 // pred_fallthru
                _
            $region36: #{tpu_custom_call.1} parent=31 // pred_fallthru
              _
            // Predicated region
            $region37: #{tpu_custom_call.1} parent=31 // pred_check
              _
            $region38: #{tpu_custom_call.1} parent=31 // pred_check_branch
              %172 = sbr.rel (0) target = $region40
            $region39: #{tpu_custom_call.1} parent=31 // pred_region
              %s174 = ssub.s32 16, 1
              loop: start=0, step=1, limit=1
              $region41: #{tpu_custom_call.1} parent=39 // loop_pre_header
                _
              $region42: #{tpu_custom_call.1} parent=39 // loop_header
                %s176 = sphi 0, %s180
                %p177 = scmp.ge.s32.totalorder %s176, 1
                %s181 = sphi %s166, %s166
                %s182 = sphi %s164, %s164
              $region43: #{tpu_custom_call.1} parent=39 // loop_header_branch
                %179 = sbr.rel (%p177) target = $region47
              $region44: #{tpu_custom_call.1} parent=39 // loop_body
                %v183 = vld [vmem:[%s181] sm:%s174]
                %184 = vst [vmem:[%s182] sm:%s174] %v183
                %v185 = vld [vmem:[%s181 + $0x8] sm:%s174]
                %186 = vst [vmem:[%s182 + $0x4] sm:%s174] %v185
                %v187 = vld [vmem:[%s181 + $0x10] sm:%s174]
                %188 = vst [vmem:[%s182 + $0x8] sm:%s174] %v187
                %v189 = vld [vmem:[%s181 + $0x18] sm:%s174]
                %190 = vst [vmem:[%s182 + $0xc] sm:%s174] %v189
                %v191 = vld [vmem:[%s181 + $0x20] sm:%s174]
                %192 = vst [vmem:[%s182 + $0x10] sm:%s174] %v191
                %v193 = vld [vmem:[%s181 + $0x28] sm:%s174]
                %194 = vst [vmem:[%s182 + $0x14] sm:%s174] %v193
                %v195 = vld [vmem:[%s181 + $0x30] sm:%s174]
                %196 = vst [vmem:[%s182 + $0x18] sm:%s174] %v195
                %v197 = vld [vmem:[%s181 + $0x38] sm:%s174]
                %198 = vst [vmem:[%s182 + $0x1c] sm:%s174] %v197
                %v199 = vld [vmem:[%s181 + $0x40] sm:%s174]
                %200 = vst [vmem:[%s182 + $0x20] sm:%s174] %v199
              $region45: #{tpu_custom_call.1} parent=39 // loop_footer
                %s180 = sadd.s32 1, %s176
              $region46: #{tpu_custom_call.1} parent=39 // loop_footer_branch
                %175 = sbr.rel target = $region42
              $region47: #{tpu_custom_call.1} parent=39 // loop_exit
                _
            $region40: #{tpu_custom_call.1} parent=31 // pred_fallthru
              _
          $region32: #{tpu_custom_call.1} parent=27 // pred_fallthru
            _
          %239 = vnop
        $region28: #{tpu_custom_call.1} parent=23 // pred_fallthru
          _
        // Predicated region
        $region66: #{tpu_custom_call.1} parent=23 // pred_check
          %p240 = pneg %p59
        $region67: #{tpu_custom_call.1} parent=23 // pred_check_branch
          %242 = sbr.rel (%p240) target = $region69
        $region68: #{tpu_custom_call.1} parent=23 // pred_region
          %p243 = scmp.lt.s32.totalorder %s13, 1
          %s244 = scalar_select %p243, %s13, 1
          %s245 = smul.addr %s244, 8
          %s246 = scalar_lea.vmem %s1, %s245
        $region69: #{tpu_custom_call.1} parent=23 // pred_fallthru
          _
      $region24: #{tpu_custom_call.1} parent=5 // pred_fallthru
        _
      %p247 = scmp.le.s32.totalorder 1, %s13
      %p248 = scmp.lt.s32.totalorder %s13, 3
      %p249 = pnand %p247, %p248
      %p250 = pneg %p249
      // Predicated region
      $region70: #{tpu_custom_call.1} parent=5 // pred_check
        _
      $region71: #{tpu_custom_call.1} parent=5 // pred_check_branch
        %252 = sbr.rel (%p249) target = $region73
      $region72: #{tpu_custom_call.1} parent=5 // pred_region
        %s253 = ssub.s32 %s13, 1
        %s254 = sand.u32 %s26, 1
        %s255 = sand.u32 %s26, 1
        %s256 = smul.addr %s255, 36
        %s257 = scalar_lea.vmem [#allocation3], %s256
        // Predicated region
        $region74: #{tpu_custom_call.1} parent=72 // pred_check
          %p258 = pneg %p39
        $region75: #{tpu_custom_call.1} parent=72 // pred_check_branch
          %260 = sbr.rel (%p258) target = $region77
        $region76: #{tpu_custom_call.1} parent=72 // pred_region
          _
        $region77: #{tpu_custom_call.1} parent=72 // pred_fallthru
          _
        %s261 = sand.u32 %s26, 1
        %s262 = sand.u32 %s26, 1
        %s263 = smul.addr %s262, 36
        %s264 = scalar_lea.vmem [#allocation3], %s263
        %p265 = pneg %p39
        %p266 = pneg %p36
        %p267 = scmp.lt.s32.totalorder %s18, 1
        %s268 = scalar_select %p267, %s18, 1
        %s269 = smul.addr %s268, 8
        %s270 = scalar_lea.vmem %s1, %s269
        %p271 = pneg %p65
        %p272 = pneg %p62
        %p273 = pneg %p86
        %p274 = pneg %p83
        %p275 = pneg %p107
        %p276 = pneg %p104
        %p277 = pneg %p133
        %p278 = pneg %p130
        %s279 = sand.u32 %s120, 1
        %s280 = scalar_lea.sflag [#allocation5], %s279
        %s281 = sand.u32 %s120, 1
        %s282 = smul.addr %s281, 4
        %s283 = scalar_lea.vmem [#allocation4], %s282
        %p284 = scmp.lt.s32.totalorder %s18, 1
        %s285 = scalar_select %p284, %s18, 1
        %s286 = smul.addr %s285, 8
        %s287 = scalar_lea.vmem %s1, %s286
        %v290 = vld [vmem:[%s287] sm:$0xff]
        %v291 = vld [vmem:[%s257] sm:$0xf]
        %292 = vst [vmem:[#allocation2] sm:$0xf] %v291
        %vm293 = vcmask 1040384
        %vm294 = vsmask.f32 256
        %vm295 = vmand %vm293, %vm294
        %v296 = vld [vmem:[#allocation2 + $0x4] sm:$0x1]
        %v297 = vsel %vm295, 1065369472, %v296
        %298 = vst [vmem:[#allocation2 + $0x4] sm:$0x1] %v297
        %v299 = vld [vmem:[%s257 + $0x4] sm:$0xf]
        %v300 = vunpack.c.l.bf16 %v299
        %v301 = vld [vmem:[%s257 + $0x14] sm:$0xf]
        %v302 = vunpack.c.l.bf16 %v301
        %v303 = vperm.slane %v290, 0
        %v304 = vmul.f32 %v300, %v303
        %v305 = vperm.slane %v290, 4
        %v306 = vmul.f32 %v302, %v305
        %v307 = vsub.f32 %v304, %v306
        %v308 = vpack.c.bf16 %v307, %v307
        %v310 = vshrl.u32 %v308, 16
        %v312 = vrot.slane %v310, 7
        %v313 = vshll.u32 %v308, 16
        %v315 = vor.u32 %v312, %v313
        %v316 = vrot.slane %v312, 4
        %vm319 = vcmask 1043456
        %vm320 = vsmask.f32 7938
        %vm321 = vmand %vm319, %vm320
        %v322 = vld [vmem:[#allocation2 + $0x4] sm:$0xf]
        %v323 = vsel %vm321, %v315, %v322
        %324 = vst [vmem:[#allocation2 + $0x4] sm:$0xf] %v323
        %v325 = vld [vmem:[#allocation2 + $0x8] sm:$0x1]
        %v326 = vsel %vm295, %v316, %v325
        %327 = vst [vmem:[#allocation2 + $0x8] sm:$0x1] %v326
        %v328 = vmul.f32 %v300, %v305
        %v329 = vmul.f32 %v302, %v303
        %v330 = vadd.f32 %v328, %v329
        %v331 = vpack.c.bf16 %v330, %v330
        %v333 = vshrl.u32 %v331, 16
        %v335 = vrot.slane %v333, 7
        %v336 = vshll.u32 %v331, 16
        %v338 = vor.u32 %v335, %v336
        %v339 = vrot.slane %v335, 4
        %v342 = vld [vmem:[#allocation2 + $0x14] sm:$0xf]
        %v343 = vsel %vm321, %v338, %v342
        %344 = vst [vmem:[#allocation2 + $0x14] sm:$0xf] %v343
        %v345 = vld [vmem:[#allocation2 + $0x18] sm:$0x1]
        %v346 = vsel %vm295, %v339, %v345
        %347 = vst [vmem:[#allocation2 + $0x18] sm:$0x1] %v346
        %v348 = vld [vmem:[%s257 + $0x8] sm:$0xf]
        %v349 = vunpack.c.l.bf16 %v348
        %v350 = vld [vmem:[%s257 + $0x18] sm:$0xf]
        %v351 = vunpack.c.l.bf16 %v350
        %v352 = vperm.slane %v290, 1
        %v353 = vmul.f32 %v349, %v352
        %v354 = vperm.slane %v290, 5
        %v355 = vmul.f32 %v351, %v354
        %v356 = vsub.f32 %v353, %v355
        %v357 = vpack.c.bf16 %v356, %v356
        %v359 = vshrl.u32 %v357, 16
        %v361 = vrot.slane %v359, 7
        %v362 = vshll.u32 %v357, 16
        %v364 = vor.u32 %v361, %v362
        %v365 = vrot.slane %v361, 4
        %v368 = vld [vmem:[#allocation2 + $0x8] sm:$0xf]
        %v369 = vsel %vm321, %v364, %v368
        %370 = vst [vmem:[#allocation2 + $0x8] sm:$0xf] %v369
        %v371 = vld [vmem:[#allocation2 + $0xc] sm:$0x1]
        %v372 = vsel %vm295, %v365, %v371
        %373 = vst [vmem:[#allocation2 + $0xc] sm:$0x1] %v372
        %v374 = vmul.f32 %v349, %v354
        %v375 = vmul.f32 %v351, %v352
        %v376 = vadd.f32 %v374, %v375
        %v377 = vpack.c.bf16 %v376, %v376
        %v379 = vshrl.u32 %v377, 16
        %v381 = vrot.slane %v379, 7
        %v382 = vshll.u32 %v377, 16
        %v384 = vor.u32 %v381, %v382
        %v385 = vrot.slane %v381, 4
        %v388 = vld [vmem:[#allocation2 + $0x18] sm:$0xf]
        %v389 = vsel %vm321, %v384, %v388
        %390 = vst [vmem:[#allocation2 + $0x18] sm:$0xf] %v389
        %v391 = vld [vmem:[#allocation2 + $0x1c] sm:$0x1]
        %v392 = vsel %vm295, %v385, %v391
        %393 = vst [vmem:[#allocation2 + $0x1c] sm:$0x1] %v392
        %v394 = vld [vmem:[%s257 + $0xc] sm:$0xf]
        %v395 = vunpack.c.l.bf16 %v394
        %v396 = vld [vmem:[%s257 + $0x1c] sm:$0xf]
        %v397 = vunpack.c.l.bf16 %v396
        %v398 = vperm.slane %v290, 2
        %v399 = vmul.f32 %v395, %v398
        %v400 = vperm.slane %v290, 6
        %v401 = vmul.f32 %v397, %v400
        %v402 = vsub.f32 %v399, %v401
        %v403 = vpack.c.bf16 %v402, %v402
        %v405 = vshrl.u32 %v403, 16
        %v407 = vrot.slane %v405, 7
        %v408 = vshll.u32 %v403, 16
        %v410 = vor.u32 %v407, %v408
        %v411 = vrot.slane %v407, 4
        %v414 = vld [vmem:[#allocation2 + $0xc] sm:$0xf]
        %v415 = vsel %vm321, %v410, %v414
        %416 = vst [vmem:[#allocation2 + $0xc] sm:$0xf] %v415
        %v417 = vld [vmem:[#allocation2 + $0x10] sm:$0x1]
        %v418 = vsel %vm295, %v411, %v417
        %419 = vst [vmem:[#allocation2 + $0x10] sm:$0x1] %v418
        %v420 = vmul.f32 %v395, %v400
        %v421 = vmul.f32 %v397, %v398
        %v422 = vadd.f32 %v420, %v421
        %v423 = vpack.c.bf16 %v422, %v422
        %v425 = vshrl.u32 %v423, 16
        %v427 = vrot.slane %v425, 7
        %v428 = vshll.u32 %v423, 16
        %v430 = vor.u32 %v427, %v428
        %v431 = vrot.slane %v427, 4
        %v434 = vld [vmem:[#allocation2 + $0x1c] sm:$0xf]
        %v435 = vsel %vm321, %v430, %v434
        %436 = vst [vmem:[#allocation2 + $0x1c] sm:$0xf] %v435
        %v437 = vld [vmem:[#allocation2 + $0x20] sm:$0x1]
        %v438 = vsel %vm295, %v431, %v437
        %439 = vst [vmem:[#allocation2 + $0x20] sm:$0x1] %v438
        %v440 = vld [vmem:[%s257 + $0x10] sm:$0xf]
        %v441 = vunpack.c.l.bf16 %v440
        %v442 = vld [vmem:[%s257 + $0x20] sm:$0xf]
        %v443 = vunpack.c.l.bf16 %v442
        %v444 = vperm.slane %v290, 3
        %v445 = vmul.f32 %v441, %v444
        %v446 = vperm.slane %v290, 7
        %v447 = vmul.f32 %v443, %v446
        %v448 = vsub.f32 %v445, %v447
        %v449 = vpack.c.bf16 %v448, %v448
        %v451 = vshrl.u32 %v449, 16
        %v453 = vrot.slane %v451, 7
        %v454 = vshll.u32 %v449, 16
        %v456 = vor.u32 %v453, %v454
        %v457 = vrot.slane %v453, 4
        %v460 = vld [vmem:[#allocation2 + $0x10] sm:$0xf]
        %v461 = vsel %vm321, %v456, %v460
        %462 = vst [vmem:[#allocation2 + $0x10] sm:$0xf] %v461
        %v463 = vld [vmem:[#allocation2 + $0x14] sm:$0x1]
        %v464 = vsel %vm295, %v457, %v463
        %465 = vst [vmem:[#allocation2 + $0x14] sm:$0x1] %v464
        %v466 = vmul.f32 %v441, %v446
        %v467 = vmul.f32 %v443, %v444
        %v468 = vadd.f32 %v466, %v467
        %v469 = vpack.c.bf16 %v468, %v468
        %v471 = vshrl.u32 %v469, 16
        %v473 = vrot.slane %v471, 7
        %v474 = vshll.u32 %v469, 16
        %v476 = vor.u32 %v473, %v474
        %v477 = vrot.slane %v473, 4
        %v480 = vld [vmem:[#allocation2 + $0x20] sm:$0xf]
        %v481 = vsel %vm321, %v476, %v480
        %482 = vst [vmem:[#allocation2 + $0x20] sm:$0xf] %v481
        %v483 = vld [vmem:[#allocation2 + $0x24] sm:$0x1]
        %v484 = vsel %vm295, %v477, %v483
        %485 = vst [vmem:[#allocation2 + $0x24] sm:$0x1] %v484
        %v486 = vld [vmem:[%s2] sm:$0xf]
        %v487 = vld [vmem:[%s2 + $0x4] sm:$0xf]
        %v488 = vld [vmem:[%s2 + $0x8] sm:$0xf]
        %v489 = vld [vmem:[%s2 + $0xc] sm:$0xf]
        %v490 = vld [vmem:[%s2 + $0x10] sm:$0xf]
        %v491 = vld [vmem:[%s2 + $0x14] sm:$0xf]
        %v492 = vld [vmem:[%s2 + $0x18] sm:$0xf]
        %v493 = vld [vmem:[%s2 + $0x1c] sm:$0xf]
        %v494 = vld [vmem:[%s2 + $0x20] sm:$0xf]
        %v495 = vld [vmem:[%s2 + $0x24] sm:$0xf]
        %v496 = vld [vmem:[%s2 + $0x28] sm:$0xf]
        %v497 = vld [vmem:[%s2 + $0x2c] sm:$0xf]
        %v498 = vld [vmem:[%s2 + $0x30] sm:$0xf]
        %v499 = vld [vmem:[%s2 + $0x34] sm:$0xf]
        %v500 = vld [vmem:[%s2 + $0x38] sm:$0xf]
        %v501 = vld [vmem:[%s2 + $0x3c] sm:$0xf]
        %v502 = vld [vmem:[%s2 + $0x40] sm:$0xf]
        %v503 = vld [vmem:[%s2 + $0x44] sm:$0xf]
        %v504 = vld [vmem:[%s2 + $0x48] sm:$0xf]
        %v505 = vld [vmem:[%s2 + $0x4c] sm:$0xf]
        %v506 = vld [vmem:[%s2 + $0x50] sm:$0xf]
        %v507 = vld [vmem:[%s2 + $0x54] sm:$0xf]
        %v508 = vld [vmem:[%s2 + $0x58] sm:$0xf]
        %v509 = vld [vmem:[%s2 + $0x5c] sm:$0xf]
        %v510 = vld [vmem:[%s2 + $0x60] sm:$0xf]
        %v511 = vld [vmem:[%s2 + $0x64] sm:$0xf]
        %v512 = vld [vmem:[%s2 + $0x68] sm:$0xf]
        %v513 = vld [vmem:[%s2 + $0x6c] sm:$0xf]
        %v514 = vld [vmem:[%s2 + $0x70] sm:$0xf]
        %v515 = vld [vmem:[%s2 + $0x74] sm:$0xf]
        %v516 = vld [vmem:[%s2 + $0x78] sm:$0xf]
        %v517 = vld [vmem:[%s2 + $0x7c] sm:$0xf]
        %v518 = vld [vmem:[%s2 + $0x80] sm:$0xf]
        %v519 = vld [vmem:[%s2 + $0x84] sm:$0xf]
        %v520 = vld [vmem:[%s2 + $0x88] sm:$0xf]
        %v521 = vld [vmem:[%s2 + $0x8c] sm:$0xf]
        %v522 = vld [vmem:[%s2 + $0x90] sm:$0xf]
        %v523 = vld [vmem:[%s2 + $0x94] sm:$0xf]
        %v524 = vld [vmem:[%s2 + $0x98] sm:$0xf]
        %v525 = vld [vmem:[%s2 + $0x9c] sm:$0xf]
        %v526 = vld [vmem:[%s2 + $0xa0] sm:$0xf]
        %v527 = vld [vmem:[%s2 + $0xa4] sm:$0xf]
        %v528 = vld [vmem:[%s2 + $0xa8] sm:$0xf]
        %v529 = vld [vmem:[%s2 + $0xac] sm:$0xf]
        %v530 = vld [vmem:[%s2 + $0xb0] sm:$0xf]
        %v531 = vld [vmem:[%s2 + $0xb4] sm:$0xf]
        %v532 = vld [vmem:[%s2 + $0xb8] sm:$0xf]
        %v533 = vld [vmem:[%s2 + $0xbc] sm:$0xf]
        %v534 = vld [vmem:[%s2 + $0xc0] sm:$0xf]
        %v535 = vld [vmem:[%s2 + $0xc4] sm:$0xf]
        %v536 = vld [vmem:[%s2 + $0xc8] sm:$0xf]
        %v537 = vld [vmem:[%s2 + $0xcc] sm:$0xf]
        %v538 = vld [vmem:[%s2 + $0xd0] sm:$0xf]
        %v539 = vld [vmem:[%s2 + $0xd4] sm:$0xf]
        %v540 = vld [vmem:[%s2 + $0xd8] sm:$0x1]
        %v541 = vld [vmem:[#allocation2] sm:$0xf]
        %v542 = vld [vmem:[#allocation2 + $0x4] sm:$0xf]
        %v543 = vld [vmem:[#allocation2 + $0x8] sm:$0xf]
        %v544 = vld [vmem:[#allocation2 + $0xc] sm:$0xf]
        %v545 = vld [vmem:[#allocation2 + $0x10] sm:$0xf]
        %v546 = vld [vmem:[#allocation2 + $0x14] sm:$0xf]
        %v547 = vld [vmem:[#allocation2 + $0x18] sm:$0xf]
        %v548 = vld [vmem:[#allocation2 + $0x1c] sm:$0xf]
        %v549 = vld [vmem:[#allocation2 + $0x20] sm:$0xf]
        %v550 = vld [vmem:[#allocation2 + $0x24] sm:$0x1]
        %v606 = vunpack.c.l.b16 %v486
        %v607 = vunpack.c.l.b16 %v487
        %v608 = vunpack.c.l.b16 %v488
        %v609 = vunpack.c.l.b16 %v489
        %v610 = vunpack.c.l.b16 %v490
        %v611 = vunpack.c.l.b16 %v491
        %v612 = vunpack.c.l.b16 %v492
        %v613 = vunpack.c.l.b16 %v493
        %v614 = vunpack.c.l.b16 %v494
        %v615 = vunpack.c.l.b16 %v495
        %v616 = vunpack.c.l.b16 %v496
        %v617 = vunpack.c.l.b16 %v497
        %v618 = vunpack.c.l.b16 %v498
        %v619 = vunpack.c.l.b16 %v499
        %v620 = vunpack.c.l.b16 %v500
        %v621 = vunpack.c.l.b16 %v501
        %v622 = vunpack.c.l.b16 %v502
        %v623 = vunpack.c.l.b16 %v503
        %v624 = vunpack.c.l.b16 %v504
        %v625 = vunpack.c.l.b16 %v505
        %v626 = vunpack.c.l.b16 %v506
        %v627 = vunpack.c.l.b16 %v507
        %v628 = vunpack.c.l.b16 %v508
        %v629 = vunpack.c.l.b16 %v509
        %v630 = vunpack.c.l.b16 %v510
        %v631 = vunpack.c.l.b16 %v511
        %v632 = vunpack.c.l.b16 %v512
        %v633 = vunpack.c.l.b16 %v513
        %v634 = vunpack.c.l.b16 %v514
        %v635 = vunpack.c.l.b16 %v515
        %v636 = vunpack.c.l.b16 %v516
        %v637 = vunpack.c.l.b16 %v517
        %v638 = vunpack.c.l.b16 %v518
        %v639 = vunpack.c.l.b16 %v519
        %v640 = vunpack.c.l.b16 %v520
        %v641 = vunpack.c.l.b16 %v521
        %v642 = vunpack.c.l.b16 %v522
        %v643 = vunpack.c.l.b16 %v523
        %v644 = vunpack.c.l.b16 %v524
        %v645 = vunpack.c.l.b16 %v525
        %v646 = vunpack.c.l.b16 %v526
        %v647 = vunpack.c.l.b16 %v527
        %v648 = vunpack.c.l.b16 %v528
        %v649 = vunpack.c.l.b16 %v529
        %v650 = vunpack.c.l.b16 %v530
        %v651 = vunpack.c.l.b16 %v531
        %v652 = vunpack.c.l.b16 %v532
        %v653 = vunpack.c.l.b16 %v533
        %v654 = vunpack.c.l.b16 %v534
        %v655 = vunpack.c.l.b16 %v535
        %v656 = vunpack.c.l.b16 %v536
        %v657 = vunpack.c.l.b16 %v537
        %v658 = vunpack.c.l.b16 %v538
        %v659 = vunpack.c.l.b16 %v539
        %v660 = vunpack.c.l.b16 %v540
        %v661 = vpack.c.b16 %v607, %v606
        %v662 = vpack.c.b16 %v609, %v608
        %v663 = vpack.c.b16 %v611, %v610
        %v664 = vpack.c.b16 %v613, %v612
        %v665 = vpack.c.b16 %v615, %v614
        %v666 = vpack.c.b16 %v617, %v616
        %v667 = vpack.c.b16 %v619, %v618
        %v668 = vpack.c.b16 %v621, %v620
        %v669 = vpack.c.b16 %v623, %v622
        %v670 = vpack.c.b16 %v625, %v624
        %v671 = vpack.c.b16 %v627, %v626
        %v672 = vpack.c.b16 %v629, %v628
        %v673 = vpack.c.b16 %v631, %v630
        %v674 = vpack.c.b16 %v633, %v632
        %v675 = vpack.c.b16 %v635, %v634
        %v676 = vpack.c.b16 %v637, %v636
        %v677 = vpack.c.b16 %v639, %v638
        %v678 = vpack.c.b16 %v641, %v640
        %v679 = vpack.c.b16 %v643, %v642
        %v680 = vpack.c.b16 %v645, %v644
        %v681 = vpack.c.b16 %v647, %v646
        %v682 = vpack.c.b16 %v649, %v648
        %v683 = vpack.c.b16 %v651, %v650
        %v684 = vpack.c.b16 %v653, %v652
        %v685 = vpack.c.b16 %v655, %v654
        %v686 = vpack.c.b16 %v657, %v656
        %v687 = vpack.c.b16 %v659, %v658
        %v688 = vpack.c.b16 %v660, %v660
        %v699 = vunpack.c.l.b16 %v541
        %v700 = vunpack.c.l.b16 %v542
        %v701 = vunpack.c.l.b16 %v543
        %v702 = vunpack.c.l.b16 %v544
        %v703 = vunpack.c.l.b16 %v545
        %v704 = vunpack.c.l.b16 %v546
        %v705 = vunpack.c.l.b16 %v547
        %v706 = vunpack.c.l.b16 %v548
        %v707 = vunpack.c.l.b16 %v549
        %v708 = vunpack.c.l.b16 %v550
        %v709 = vpack.c.b16 %v700, %v699
        %v710 = vpack.c.b16 %v702, %v701
        %v711 = vpack.c.b16 %v704, %v703
        %v712 = vpack.c.b16 %v706, %v705
        %v713 = vpack.c.b16 %v708, %v707
        %vm718 = vcmask 596992
        %v720 = vsel %vm718, %v661, 0
        %v723 = vsel %vm718, %v662, 0
        %v726 = vsel %vm718, %v663, 0
        %v729 = vsel %vm718, %v664, 0
        %v732 = vsel %vm718, %v665, 0
        %v735 = vsel %vm718, %v666, 0
        %v738 = vsel %vm718, %v667, 0
        %v741 = vsel %vm718, %v668, 0
        %v744 = vsel %vm718, %v669, 0
        %v747 = vsel %vm718, %v670, 0
        %v750 = vsel %vm718, %v671, 0
        %v753 = vsel %vm718, %v672, 0
        %v756 = vsel %vm718, %v673, 0
        %v759 = vsel %vm718, %v674, 0
        %v762 = vsel %vm718, %v675, 0
        %v765 = vsel %vm718, %v676, 0
        %v768 = vsel %vm718, %v677, 0
        %v771 = vsel %vm718, %v678, 0
        %v774 = vsel %vm718, %v679, 0
        %v777 = vsel %vm718, %v680, 0
        %v780 = vsel %vm718, %v681, 0
        %v783 = vsel %vm718, %v682, 0
        %v786 = vsel %vm718, %v683, 0
        %v789 = vsel %vm718, %v684, 0
        %v792 = vsel %vm718, %v685, 0
        %v795 = vsel %vm718, %v686, 0
        %v798 = vsel %vm718, %v687, 0
        %v801 = vsel %vm718, %v688, 0
        %vm803 = vcmask 1043456
        %vm804 = vcmask 1044480
        %v805 = vsel %vm803, 4294967295, 65535
        %v806 = vsel %vm804, %v805, 0
        %v808 = vand.u32 %v713, %v806
        %810 = vmatpush.bf16.msra.mxu0 0
        %811 = vmatpush.bf16.msra.mxu0 0
        %812 = vmatpush.bf16.msra.mxu0 0
        %813 = vmatpush.bf16.msra.mxu0 %v808
        %814 = vmatpush.bf16.msra.mxu0 %v712
        %815 = vmatpush.bf16.msra.mxu0 %v711
        %816 = vmatpush.bf16.msra.mxu0 %v710
        %817 = vmatpush.bf16.msra.mxu0 %v709
        %818 = vmatmul.bf16.gmra.mxu0 %v720
        %v819 = vpop.f32.mrf.mxu0
        %v820 = vadd.f32 0.0, %v819
        %v821 = vpop.f32.mrf.mxu0
        %v822 = vadd.f32 0.0, %v821
        %823 = vmatmul.bf16.gmra.mxu0 %v723
        %v824 = vpop.f32.mrf.mxu0
        %v825 = vadd.f32 0.0, %v824
        %v826 = vpop.f32.mrf.mxu0
        %v827 = vadd.f32 0.0, %v826
        %828 = vmatmul.bf16.gmra.mxu0 %v726
        %v829 = vpop.f32.mrf.mxu0
        %v830 = vadd.f32 0.0, %v829
        %v831 = vpop.f32.mrf.mxu0
        %v832 = vadd.f32 0.0, %v831
        %833 = vmatmul.bf16.gmra.mxu0 %v729
        %v834 = vpop.f32.mrf.mxu0
        %v835 = vadd.f32 0.0, %v834
        %v836 = vpop.f32.mrf.mxu0
        %v837 = vadd.f32 0.0, %v836
        %838 = vmatmul.bf16.gmra.mxu0 %v732
        %v839 = vpop.f32.mrf.mxu0
        %v840 = vadd.f32 0.0, %v839
        %v841 = vpop.f32.mrf.mxu0
        %v842 = vadd.f32 0.0, %v841
        %843 = vmatmul.bf16.gmra.mxu0 %v735
        %v844 = vpop.f32.mrf.mxu0
        %v845 = vadd.f32 0.0, %v844
        %v846 = vpop.f32.mrf.mxu0
        %v847 = vadd.f32 0.0, %v846
        %848 = vmatmul.bf16.gmra.mxu0 %v738
        %v849 = vpop.f32.mrf.mxu0
        %v850 = vadd.f32 0.0, %v849
        %v851 = vpop.f32.mrf.mxu0
        %v852 = vadd.f32 0.0, %v851
        %853 = vmatmul.bf16.gmra.mxu0 %v741
        %v854 = vpop.f32.mrf.mxu0
        %v855 = vadd.f32 0.0, %v854
        %v856 = vpop.f32.mrf.mxu0
        %v857 = vadd.f32 0.0, %v856
        %858 = vmatmul.bf16.gmra.mxu0 %v744
        %v859 = vpop.f32.mrf.mxu0
        %v860 = vadd.f32 0.0, %v859
        %v861 = vpop.f32.mrf.mxu0
        %v862 = vadd.f32 0.0, %v861
        %863 = vmatmul.bf16.gmra.mxu0 %v747
        %v864 = vpop.f32.mrf.mxu0
        %v865 = vadd.f32 0.0, %v864
        %v866 = vpop.f32.mrf.mxu0
        %v867 = vadd.f32 0.0, %v866
        %868 = vmatmul.bf16.gmra.mxu0 %v750
        %v869 = vpop.f32.mrf.mxu0
        %v870 = vadd.f32 0.0, %v869
        %v871 = vpop.f32.mrf.mxu0
        %v872 = vadd.f32 0.0, %v871
        %873 = vmatmul.bf16.gmra.mxu0 %v753
        %v874 = vpop.f32.mrf.mxu0
        %v875 = vadd.f32 0.0, %v874
        %v876 = vpop.f32.mrf.mxu0
        %v877 = vadd.f32 0.0, %v876
        %878 = vmatmul.bf16.gmra.mxu0 %v756
        %v879 = vpop.f32.mrf.mxu0
        %v880 = vadd.f32 0.0, %v879
        %v881 = vpop.f32.mrf.mxu0
        %v882 = vadd.f32 0.0, %v881
        %883 = vmatmul.bf16.gmra.mxu0 %v759
        %v884 = vpop.f32.mrf.mxu0
        %v885 = vadd.f32 0.0, %v884
        %v886 = vpop.f32.mrf.mxu0
        %v887 = vadd.f32 0.0, %v886
        %888 = vmatmul.bf16.gmra.mxu0 %v762
        %v889 = vpop.f32.mrf.mxu0
        %v890 = vadd.f32 0.0, %v889
        %v891 = vpop.f32.mrf.mxu0
        %v892 = vadd.f32 0.0, %v891
        %893 = vmatmul.bf16.gmra.mxu0 %v765
        %v894 = vpop.f32.mrf.mxu0
        %v895 = vadd.f32 0.0, %v894
        %v896 = vpop.f32.mrf.mxu0
        %v897 = vadd.f32 0.0, %v896
        %898 = vmatmul.bf16.gmra.mxu0 %v768
        %v899 = vpop.f32.mrf.mxu0
        %v900 = vadd.f32 0.0, %v899
        %v901 = vpop.f32.mrf.mxu0
        %v902 = vadd.f32 0.0, %v901
        %903 = vmatmul.bf16.gmra.mxu0 %v771
        %v904 = vpop.f32.mrf.mxu0
        %v905 = vadd.f32 0.0, %v904
        %v906 = vpop.f32.mrf.mxu0
        %v907 = vadd.f32 0.0, %v906
        %908 = vmatmul.bf16.gmra.mxu0 %v774
        %v909 = vpop.f32.mrf.mxu0
        %v910 = vadd.f32 0.0, %v909
        %v911 = vpop.f32.mrf.mxu0
        %v912 = vadd.f32 0.0, %v911
        %913 = vmatmul.bf16.gmra.mxu0 %v777
        %v914 = vpop.f32.mrf.mxu0
        %v915 = vadd.f32 0.0, %v914
        %v916 = vpop.f32.mrf.mxu0
        %v917 = vadd.f32 0.0, %v916
        %918 = vmatmul.bf16.gmra.mxu0 %v780
        %v919 = vpop.f32.mrf.mxu0
        %v920 = vadd.f32 0.0, %v919
        %v921 = vpop.f32.mrf.mxu0
        %v922 = vadd.f32 0.0, %v921
        %923 = vmatmul.bf16.gmra.mxu0 %v783
        %v924 = vpop.f32.mrf.mxu0
        %v925 = vadd.f32 0.0, %v924
        %v926 = vpop.f32.mrf.mxu0
        %v927 = vadd.f32 0.0, %v926
        %928 = vmatmul.bf16.gmra.mxu0 %v786
        %v929 = vpop.f32.mrf.mxu0
        %v930 = vadd.f32 0.0, %v929
        %v931 = vpop.f32.mrf.mxu0
        %v932 = vadd.f32 0.0, %v931
        %933 = vmatmul.bf16.gmra.mxu0 %v789
        %v934 = vpop.f32.mrf.mxu0
        %v935 = vadd.f32 0.0, %v934
        %v936 = vpop.f32.mrf.mxu0
        %v937 = vadd.f32 0.0, %v936
        %938 = vmatmul.bf16.gmra.mxu0 %v792
        %v939 = vpop.f32.mrf.mxu0
        %v940 = vadd.f32 0.0, %v939
        %v941 = vpop.f32.mrf.mxu0
        %v942 = vadd.f32 0.0, %v941
        %943 = vmatmul.bf16.gmra.mxu0 %v795
        %v944 = vpop.f32.mrf.mxu0
        %v945 = vadd.f32 0.0, %v944
        %v946 = vpop.f32.mrf.mxu0
        %v947 = vadd.f32 0.0, %v946
        %948 = vmatmul.bf16.gmra.mxu0 %v798
        %v949 = vpop.f32.mrf.mxu0
        %v950 = vadd.f32 0.0, %v949
        %v951 = vpop.f32.mrf.mxu0
        %v952 = vadd.f32 0.0, %v951
        %953 = vmatmul.bf16.gmra.mxu0 %v801
        %v954 = vpop.f32.mrf.mxu0
        %v955 = vadd.f32 0.0, %v954
        %v956 = vpop.f32.mrf.mxu0
        %957 = vdwg.mxu0
        %v958 = vpack.c.bf16 %v820, %v820
        %v959 = vpack.c.bf16 %v822, %v822
        %v960 = vpack.c.bf16 %v825, %v825
        %v961 = vpack.c.bf16 %v827, %v827
        %v962 = vpack.c.bf16 %v830, %v830
        %v963 = vpack.c.bf16 %v832, %v832
        %v964 = vpack.c.bf16 %v835, %v835
        %v965 = vpack.c.bf16 %v837, %v837
        %v966 = vpack.c.bf16 %v840, %v840
        %v967 = vpack.c.bf16 %v842, %v842
        %v968 = vpack.c.bf16 %v845, %v845
        %v969 = vpack.c.bf16 %v847, %v847
        %v970 = vpack.c.bf16 %v850, %v850
        %v971 = vpack.c.bf16 %v852, %v852
        %v972 = vpack.c.bf16 %v855, %v855
        %v973 = vpack.c.bf16 %v857, %v857
        %v974 = vpack.c.bf16 %v860, %v860
        %v975 = vpack.c.bf16 %v862, %v862
        %v976 = vpack.c.bf16 %v865, %v865
        %v977 = vpack.c.bf16 %v867, %v867
        %v978 = vpack.c.bf16 %v870, %v870
        %v979 = vpack.c.bf16 %v872, %v872
        %v980 = vpack.c.bf16 %v875, %v875
        %v981 = vpack.c.bf16 %v877, %v877
        %v982 = vpack.c.bf16 %v880, %v880
        %v983 = vpack.c.bf16 %v882, %v882
        %v984 = vpack.c.bf16 %v885, %v885
        %v985 = vpack.c.bf16 %v887, %v887
        %v986 = vpack.c.bf16 %v890, %v890
        %v987 = vpack.c.bf16 %v892, %v892
        %v988 = vpack.c.bf16 %v895, %v895
        %v989 = vpack.c.bf16 %v897, %v897
        %v990 = vpack.c.bf16 %v900, %v900
        %v991 = vpack.c.bf16 %v902, %v902
        %v992 = vpack.c.bf16 %v905, %v905
        %v993 = vpack.c.bf16 %v907, %v907
        %v994 = vpack.c.bf16 %v910, %v910
        %v995 = vpack.c.bf16 %v912, %v912
        %v996 = vpack.c.bf16 %v915, %v915
        %v997 = vpack.c.bf16 %v917, %v917
        %v998 = vpack.c.bf16 %v920, %v920
        %v999 = vpack.c.bf16 %v922, %v922
        %v1000 = vpack.c.bf16 %v925, %v925
        %v1001 = vpack.c.bf16 %v927, %v927
        %v1002 = vpack.c.bf16 %v930, %v930
        %v1003 = vpack.c.bf16 %v932, %v932
        %v1004 = vpack.c.bf16 %v935, %v935
        %v1005 = vpack.c.bf16 %v937, %v937
        %v1006 = vpack.c.bf16 %v940, %v940
        %v1007 = vpack.c.bf16 %v942, %v942
        %v1008 = vpack.c.bf16 %v945, %v945
        %v1009 = vpack.c.bf16 %v947, %v947
        %v1010 = vpack.c.bf16 %v950, %v950
        %v1011 = vpack.c.bf16 %v952, %v952
        %v1012 = vpack.c.bf16 %v955, %v955
        %v1013 = vunpack.c.l.bf16 %v958
        %v1014 = vunpack.c.l.bf16 %v959
        %v1015 = vunpack.c.l.bf16 %v960
        %v1016 = vunpack.c.l.bf16 %v961
        %v1017 = vunpack.c.l.bf16 %v962
        %v1018 = vunpack.c.l.bf16 %v963
        %v1019 = vunpack.c.l.bf16 %v964
        %v1020 = vunpack.c.l.bf16 %v965
        %v1021 = vunpack.c.l.bf16 %v966
        %v1022 = vunpack.c.l.bf16 %v967
        %v1023 = vunpack.c.l.bf16 %v968
        %v1024 = vunpack.c.l.bf16 %v969
        %v1025 = vunpack.c.l.bf16 %v970
        %v1026 = vunpack.c.l.bf16 %v971
        %v1027 = vunpack.c.l.bf16 %v972
        %v1028 = vunpack.c.l.bf16 %v973
        %v1029 = vunpack.c.l.bf16 %v974
        %v1030 = vunpack.c.l.bf16 %v975
        %v1031 = vunpack.c.l.bf16 %v976
        %v1032 = vunpack.c.l.bf16 %v977
        %v1033 = vunpack.c.l.bf16 %v978
        %v1034 = vunpack.c.l.bf16 %v979
        %v1035 = vunpack.c.l.bf16 %v980
        %v1036 = vunpack.c.l.bf16 %v981
        %v1037 = vunpack.c.l.bf16 %v982
        %v1038 = vunpack.c.l.bf16 %v983
        %v1039 = vunpack.c.l.bf16 %v984
        %v1040 = vunpack.c.l.bf16 %v985
        %v1041 = vunpack.c.l.bf16 %v986
        %v1042 = vunpack.c.l.bf16 %v987
        %v1043 = vunpack.c.l.bf16 %v988
        %v1044 = vunpack.c.l.bf16 %v989
        %v1045 = vunpack.c.l.bf16 %v990
        %v1046 = vunpack.c.l.bf16 %v991
        %v1047 = vunpack.c.l.bf16 %v992
        %v1048 = vunpack.c.l.bf16 %v993
        %v1049 = vunpack.c.l.bf16 %v994
        %v1050 = vunpack.c.l.bf16 %v995
        %v1051 = vunpack.c.l.bf16 %v996
        %v1052 = vunpack.c.l.bf16 %v997
        %v1053 = vunpack.c.l.bf16 %v998
        %v1054 = vunpack.c.l.bf16 %v999
        %v1055 = vunpack.c.l.bf16 %v1000
        %v1056 = vunpack.c.l.bf16 %v1001
        %v1057 = vunpack.c.l.bf16 %v1002
        %v1058 = vunpack.c.l.bf16 %v1003
        %v1059 = vunpack.c.l.bf16 %v1004
        %v1060 = vunpack.c.l.bf16 %v1005
        %v1061 = vunpack.c.l.bf16 %v1006
        %v1062 = vunpack.c.l.bf16 %v1007
        %v1063 = vunpack.c.l.bf16 %v1008
        %v1064 = vunpack.c.l.bf16 %v1009
        %v1065 = vunpack.c.l.bf16 %v1010
        %v1066 = vunpack.c.l.bf16 %v1011
        %v1067 = vunpack.c.l.bf16 %v1012
        %v1068 = vmul.f32 %v1013, 0.010009766
        %v1069 = vmul.f32 %v1014, 0.010009766
        %v1070 = vmul.f32 %v1015, 0.010009766
        %v1071 = vmul.f32 %v1016, 0.010009766
        %v1072 = vmul.f32 %v1017, 0.010009766
        %v1073 = vmul.f32 %v1018, 0.010009766
        %v1074 = vmul.f32 %v1019, 0.010009766
        %v1075 = vmul.f32 %v1020, 0.010009766
        %v1076 = vmul.f32 %v1021, 0.010009766
        %v1077 = vmul.f32 %v1022, 0.010009766
        %v1078 = vmul.f32 %v1023, 0.010009766
        %v1079 = vmul.f32 %v1024, 0.010009766
        %v1080 = vmul.f32 %v1025, 0.010009766
        %v1081 = vmul.f32 %v1026, 0.010009766
        %v1082 = vmul.f32 %v1027, 0.010009766
        %v1083 = vmul.f32 %v1028, 0.010009766
        %v1084 = vmul.f32 %v1029, 0.010009766
        %v1085 = vmul.f32 %v1030, 0.010009766
        %v1086 = vmul.f32 %v1031, 0.010009766
        %v1087 = vmul.f32 %v1032, 0.010009766
        %v1088 = vmul.f32 %v1033, 0.010009766
        %v1089 = vmul.f32 %v1034, 0.010009766
        %v1090 = vmul.f32 %v1035, 0.010009766
        %v1091 = vmul.f32 %v1036, 0.010009766
        %v1092 = vmul.f32 %v1037, 0.010009766
        %v1093 = vmul.f32 %v1038, 0.010009766
        %v1094 = vmul.f32 %v1039, 0.010009766
        %v1095 = vmul.f32 %v1040, 0.010009766
        %v1096 = vmul.f32 %v1041, 0.010009766
        %v1097 = vmul.f32 %v1042, 0.010009766
        %v1098 = vmul.f32 %v1043, 0.010009766
        %v1099 = vmul.f32 %v1044, 0.010009766
        %v1100 = vmul.f32 %v1045, 0.010009766
        %v1101 = vmul.f32 %v1046, 0.010009766
        %v1102 = vmul.f32 %v1047, 0.010009766
        %v1103 = vmul.f32 %v1048, 0.010009766
        %v1104 = vmul.f32 %v1049, 0.010009766
        %v1105 = vmul.f32 %v1050, 0.010009766
        %v1106 = vmul.f32 %v1051, 0.010009766
        %v1107 = vmul.f32 %v1052, 0.010009766
        %v1108 = vmul.f32 %v1053, 0.010009766
        %v1109 = vmul.f32 %v1054, 0.010009766
        %v1110 = vmul.f32 %v1055, 0.010009766
        %v1111 = vmul.f32 %v1056, 0.010009766
        %v1112 = vmul.f32 %v1057, 0.010009766
        %v1113 = vmul.f32 %v1058, 0.010009766
        %v1114 = vmul.f32 %v1059, 0.010009766
        %v1115 = vmul.f32 %v1060, 0.010009766
        %v1116 = vmul.f32 %v1061, 0.010009766
        %v1117 = vmul.f32 %v1062, 0.010009766
        %v1118 = vmul.f32 %v1063, 0.010009766
        %v1119 = vmul.f32 %v1064, 0.010009766
        %v1120 = vmul.f32 %v1065, 0.010009766
        %v1121 = vmul.f32 %v1066, 0.010009766
        %v1122 = vmul.f32 %v1067, 0.010009766
        %v1123 = vpack.c.bf16 %v1068, %v1068
        %v1124 = vpack.c.bf16 %v1069, %v1069
        %v1125 = vpack.c.bf16 %v1070, %v1070
        %v1126 = vpack.c.bf16 %v1071, %v1071
        %v1127 = vpack.c.bf16 %v1072, %v1072
        %v1128 = vpack.c.bf16 %v1073, %v1073
        %v1129 = vpack.c.bf16 %v1074, %v1074
        %v1130 = vpack.c.bf16 %v1075, %v1075
        %v1131 = vpack.c.bf16 %v1076, %v1076
        %v1132 = vpack.c.bf16 %v1077, %v1077
        %v1133 = vpack.c.bf16 %v1078, %v1078
        %v1134 = vpack.c.bf16 %v1079, %v1079
        %v1135 = vpack.c.bf16 %v1080, %v1080
        %v1136 = vpack.c.bf16 %v1081, %v1081
        %v1137 = vpack.c.bf16 %v1082, %v1082
        %v1138 = vpack.c.bf16 %v1083, %v1083
        %v1139 = vpack.c.bf16 %v1084, %v1084
        %v1140 = vpack.c.bf16 %v1085, %v1085
        %v1141 = vpack.c.bf16 %v1086, %v1086
        %v1142 = vpack.c.bf16 %v1087, %v1087
        %v1143 = vpack.c.bf16 %v1088, %v1088
        %v1144 = vpack.c.bf16 %v1089, %v1089
        %v1145 = vpack.c.bf16 %v1090, %v1090
        %v1146 = vpack.c.bf16 %v1091, %v1091
        %v1147 = vpack.c.bf16 %v1092, %v1092
        %v1148 = vpack.c.bf16 %v1093, %v1093
        %v1149 = vpack.c.bf16 %v1094, %v1094
        %v1150 = vpack.c.bf16 %v1095, %v1095
        %v1151 = vpack.c.bf16 %v1096, %v1096
        %v1152 = vpack.c.bf16 %v1097, %v1097
        %v1153 = vpack.c.bf16 %v1098, %v1098
        %v1154 = vpack.c.bf16 %v1099, %v1099
        %v1155 = vpack.c.bf16 %v1100, %v1100
        %v1156 = vpack.c.bf16 %v1101, %v1101
        %v1157 = vpack.c.bf16 %v1102, %v1102
        %v1158 = vpack.c.bf16 %v1103, %v1103
        %v1159 = vpack.c.bf16 %v1104, %v1104
        %v1160 = vpack.c.bf16 %v1105, %v1105
        %v1161 = vpack.c.bf16 %v1106, %v1106
        %v1162 = vpack.c.bf16 %v1107, %v1107
        %v1163 = vpack.c.bf16 %v1108, %v1108
        %v1164 = vpack.c.bf16 %v1109, %v1109
        %v1165 = vpack.c.bf16 %v1110, %v1110
        %v1166 = vpack.c.bf16 %v1111, %v1111
        %v1167 = vpack.c.bf16 %v1112, %v1112
        %v1168 = vpack.c.bf16 %v1113, %v1113
        %v1169 = vpack.c.bf16 %v1114, %v1114
        %v1170 = vpack.c.bf16 %v1115, %v1115
        %v1171 = vpack.c.bf16 %v1116, %v1116
        %v1172 = vpack.c.bf16 %v1117, %v1117
        %v1173 = vpack.c.bf16 %v1118, %v1118
        %v1174 = vpack.c.bf16 %v1119, %v1119
        %v1175 = vpack.c.bf16 %v1120, %v1120
        %v1176 = vpack.c.bf16 %v1121, %v1121
        %v1177 = vpack.c.bf16 %v1122, %v1122
        %v1178 = vunpack.c.l.bf16 %v1123
        %v1179 = vunpack.c.l.bf16 %v1124
        %v1180 = vunpack.c.l.bf16 %v1125
        %v1181 = vunpack.c.l.bf16 %v1126
        %v1182 = vunpack.c.l.bf16 %v1127
        %v1183 = vunpack.c.l.bf16 %v1128
        %v1184 = vunpack.c.l.bf16 %v1129
        %v1185 = vunpack.c.l.bf16 %v1130
        %v1186 = vunpack.c.l.bf16 %v1131
        %v1187 = vunpack.c.l.bf16 %v1132
        %v1188 = vunpack.c.l.bf16 %v1133
        %v1189 = vunpack.c.l.bf16 %v1134
        %v1190 = vunpack.c.l.bf16 %v1135
        %v1191 = vunpack.c.l.bf16 %v1136
        %v1192 = vunpack.c.l.bf16 %v1137
        %v1193 = vunpack.c.l.bf16 %v1138
        %v1194 = vunpack.c.l.bf16 %v1139
        %v1195 = vunpack.c.l.bf16 %v1140
        %v1196 = vunpack.c.l.bf16 %v1141
        %v1197 = vunpack.c.l.bf16 %v1142
        %v1198 = vunpack.c.l.bf16 %v1143
        %v1199 = vunpack.c.l.bf16 %v1144
        %v1200 = vunpack.c.l.bf16 %v1145
        %v1201 = vunpack.c.l.bf16 %v1146
        %v1202 = vunpack.c.l.bf16 %v1147
        %v1203 = vunpack.c.l.bf16 %v1148
        %v1204 = vunpack.c.l.bf16 %v1149
        %v1205 = vunpack.c.l.bf16 %v1150
        %v1206 = vunpack.c.l.bf16 %v1151
        %v1207 = vunpack.c.l.bf16 %v1152
        %v1208 = vunpack.c.l.bf16 %v1153
        %v1209 = vunpack.c.l.bf16 %v1154
        %v1210 = vunpack.c.l.bf16 %v1155
        %v1211 = vunpack.c.l.bf16 %v1156
        %v1212 = vunpack.c.l.bf16 %v1157
        %v1213 = vunpack.c.l.bf16 %v1158
        %v1214 = vunpack.c.l.bf16 %v1159
        %v1215 = vunpack.c.l.bf16 %v1160
        %v1216 = vunpack.c.l.bf16 %v1161
        %v1217 = vunpack.c.l.bf16 %v1162
        %v1218 = vunpack.c.l.bf16 %v1163
        %v1219 = vunpack.c.l.bf16 %v1164
        %v1220 = vunpack.c.l.bf16 %v1165
        %v1221 = vunpack.c.l.bf16 %v1166
        %v1222 = vunpack.c.l.bf16 %v1167
        %v1223 = vunpack.c.l.bf16 %v1168
        %v1224 = vunpack.c.l.bf16 %v1169
        %v1225 = vunpack.c.l.bf16 %v1170
        %v1226 = vunpack.c.l.bf16 %v1171
        %v1227 = vunpack.c.l.bf16 %v1172
        %v1228 = vunpack.c.l.bf16 %v1173
        %v1229 = vunpack.c.l.bf16 %v1174
        %v1230 = vunpack.c.l.bf16 %v1175
        %v1231 = vunpack.c.l.bf16 %v1176
        %v1232 = vunpack.c.l.bf16 %v1177
        %v1233 = vmax.f32 %v1013, %v1178
        %v1234 = vmax.f32 %v1014, %v1179
        %v1235 = vmax.f32 %v1015, %v1180
        %v1236 = vmax.f32 %v1016, %v1181
        %v1237 = vmax.f32 %v1017, %v1182
        %v1238 = vmax.f32 %v1018, %v1183
        %v1239 = vmax.f32 %v1019, %v1184
        %v1240 = vmax.f32 %v1020, %v1185
        %v1241 = vmax.f32 %v1021, %v1186
        %v1242 = vmax.f32 %v1022, %v1187
        %v1243 = vmax.f32 %v1023, %v1188
        %v1244 = vmax.f32 %v1024, %v1189
        %v1245 = vmax.f32 %v1025, %v1190
        %v1246 = vmax.f32 %v1026, %v1191
        %v1247 = vmax.f32 %v1027, %v1192
        %v1248 = vmax.f32 %v1028, %v1193
        %v1249 = vmax.f32 %v1029, %v1194
        %v1250 = vmax.f32 %v1030, %v1195
        %v1251 = vmax.f32 %v1031, %v1196
        %v1252 = vmax.f32 %v1032, %v1197
        %v1253 = vmax.f32 %v1033, %v1198
        %v1254 = vmax.f32 %v1034, %v1199
        %v1255 = vmax.f32 %v1035, %v1200
        %v1256 = vmax.f32 %v1036, %v1201
        %v1257 = vmax.f32 %v1037, %v1202
        %v1258 = vmax.f32 %v1038, %v1203
        %v1259 = vmax.f32 %v1039, %v1204
        %v1260 = vmax.f32 %v1040, %v1205
        %v1261 = vmax.f32 %v1041, %v1206
        %v1262 = vmax.f32 %v1042, %v1207
        %v1263 = vmax.f32 %v1043, %v1208
        %v1264 = vmax.f32 %v1044, %v1209
        %v1265 = vmax.f32 %v1045, %v1210
        %v1266 = vmax.f32 %v1046, %v1211
        %v1267 = vmax.f32 %v1047, %v1212
        %v1268 = vmax.f32 %v1048, %v1213
        %v1269 = vmax.f32 %v1049, %v1214
        %v1270 = vmax.f32 %v1050, %v1215
        %v1271 = vmax.f32 %v1051, %v1216
        %v1272 = vmax.f32 %v1052, %v1217
        %v1273 = vmax.f32 %v1053, %v1218
        %v1274 = vmax.f32 %v1054, %v1219
        %v1275 = vmax.f32 %v1055, %v1220
        %v1276 = vmax.f32 %v1056, %v1221
        %v1277 = vmax.f32 %v1057, %v1222
        %v1278 = vmax.f32 %v1058, %v1223
        %v1279 = vmax.f32 %v1059, %v1224
        %v1280 = vmax.f32 %v1060, %v1225
        %v1281 = vmax.f32 %v1061, %v1226
        %v1282 = vmax.f32 %v1062, %v1227
        %v1283 = vmax.f32 %v1063, %v1228
        %v1284 = vmax.f32 %v1064, %v1229
        %v1285 = vmax.f32 %v1065, %v1230
        %v1286 = vmax.f32 %v1066, %v1231
        %v1287 = vmax.f32 %v1067, %v1232
        %v1288 = vpack.c.bf16 %v1234, %v1233
        %v1289 = vpack.c.bf16 %v1236, %v1235
        %v1290 = vpack.c.bf16 %v1238, %v1237
        %v1291 = vpack.c.bf16 %v1240, %v1239
        %v1292 = vpack.c.bf16 %v1242, %v1241
        %v1293 = vpack.c.bf16 %v1244, %v1243
        %v1294 = vpack.c.bf16 %v1246, %v1245
        %v1295 = vpack.c.bf16 %v1248, %v1247
        %v1296 = vpack.c.bf16 %v1250, %v1249
        %v1297 = vpack.c.bf16 %v1252, %v1251
        %v1298 = vpack.c.bf16 %v1254, %v1253
        %v1299 = vpack.c.bf16 %v1256, %v1255
        %v1300 = vpack.c.bf16 %v1258, %v1257
        %v1301 = vpack.c.bf16 %v1260, %v1259
        %v1302 = vpack.c.bf16 %v1262, %v1261
        %v1303 = vpack.c.bf16 %v1264, %v1263
        %v1304 = vpack.c.bf16 %v1266, %v1265
        %v1305 = vpack.c.bf16 %v1268, %v1267
        %v1306 = vpack.c.bf16 %v1270, %v1269
        %v1307 = vpack.c.bf16 %v1272, %v1271
        %v1308 = vpack.c.bf16 %v1274, %v1273
        %v1309 = vpack.c.bf16 %v1276, %v1275
        %v1310 = vpack.c.bf16 %v1278, %v1277
        %v1311 = vpack.c.bf16 %v1280, %v1279
        %v1312 = vpack.c.bf16 %v1282, %v1281
        %v1313 = vpack.c.bf16 %v1284, %v1283
        %v1314 = vpack.c.bf16 %v1286, %v1285
        %v1315 = vpack.c.bf16 %v1287, %v1287
        %v1316 = vld [vmem:[%s3] sm:$0xff]
        %1318 = vst [vmem:[#allocation1] ss:$4 sm:$0xff] %v1316
        %v1319 = vld.sshfl [vmem:[#allocation1] sm:$0xff pattern:$0x73625140]
        %v1320 = vld.sshfl [vmem:[#allocation1 + $0x8] sm:$0xff pattern:$0x73625140]
        %v1321 = vld.sshfl [vmem:[#allocation1 + $0x10] sm:$0xff pattern:$0x73625140]
        %v1322 = vld.sshfl [vmem:[#allocation1 + $0x18] sm:$0xff pattern:$0x73625140]
        %vm1326 = vcmask 400384
        %v1327 = vsel %vm1326, %v1322, 0
        %vm1329 = vcmask 1040384
        %v1330 = vsel 0, 4294967295, 65535
        %v1331 = vsel %vm1329, %v1330, 0
        %v1333 = vand.u32 %v1315, %v1331
        %1335 = vmatpush.bf16.msra.mxu0 %v1295
        %1336 = vmatpush.bf16.msra.mxu0 %v1294
        %1337 = vmatpush.bf16.msra.mxu0 %v1293
        %1338 = vmatpush.bf16.msra.mxu0 %v1292
        %1339 = vmatpush.bf16.msra.mxu0 %v1291
        %1340 = vmatpush.bf16.msra.mxu0 %v1290
        %1341 = vmatpush.bf16.msra.mxu0 %v1289
        %1342 = vmatpush.bf16.msra.mxu0 %v1288
        %1343 = vmatmul.bf16.gmra.mxu0 %v1319
        %v1344 = vpop.f32.mrf.mxu0
        %v1345 = vadd.f32 0.0, %v1344
        %v1346 = vpop.f32.mrf.mxu0
        %1347 = vdwg.mxu0
        %1348 = vmatpush.bf16.msra.mxu0 %v1303
        %1349 = vmatpush.bf16.msra.mxu0 %v1302
        %1350 = vmatpush.bf16.msra.mxu0 %v1301
        %1351 = vmatpush.bf16.msra.mxu0 %v1300
        %1352 = vmatpush.bf16.msra.mxu0 %v1299
        %1353 = vmatpush.bf16.msra.mxu0 %v1298
        %1354 = vmatpush.bf16.msra.mxu0 %v1297
        %1355 = vmatpush.bf16.msra.mxu0 %v1296
        %1356 = vmatmul.bf16.gmra.mxu0 %v1320
        %v1357 = vpop.f32.mrf.mxu0
        %v1358 = vadd.f32 %v1345, %v1357
        %v1359 = vpop.f32.mrf.mxu0
        %1360 = vdwg.mxu0
        %1361 = vmatpush.bf16.msra.mxu0 %v1311
        %1362 = vmatpush.bf16.msra.mxu0 %v1310
        %1363 = vmatpush.bf16.msra.mxu0 %v1309
        %1364 = vmatpush.bf16.msra.mxu0 %v1308
        %1365 = vmatpush.bf16.msra.mxu0 %v1307
        %1366 = vmatpush.bf16.msra.mxu0 %v1306
        %1367 = vmatpush.bf16.msra.mxu0 %v1305
        %1368 = vmatpush.bf16.msra.mxu0 %v1304
        %1369 = vmatmul.bf16.gmra.mxu0 %v1321
        %v1370 = vpop.f32.mrf.mxu0
        %v1371 = vadd.f32 %v1358, %v1370
        %v1372 = vpop.f32.mrf.mxu0
        %1373 = vdwg.mxu0
        %1374 = vmatpush.bf16.msra.mxu0 0
        %1375 = vmatpush.bf16.msra.mxu0 0
        %1376 = vmatpush.bf16.msra.mxu0 0
        %1377 = vmatpush.bf16.msra.mxu0 0
        %1378 = vmatpush.bf16.msra.mxu0 %v1333
        %1379 = vmatpush.bf16.msra.mxu0 %v1314
        %1380 = vmatpush.bf16.msra.mxu0 %v1313
        %1381 = vmatpush.bf16.msra.mxu0 %v1312
        %1382 = vmatmul.bf16.gmra.mxu0 %v1327
        %v1383 = vpop.f32.mrf.mxu0
        %v1384 = vadd.f32 %v1371, %v1383
        %v1385 = vpop.f32.mrf.mxu0
        %1386 = vdwg.mxu0
        %v1387 = vmul.f32 %v1384, %v290
        %v1389 = vrot.slane %v290, 3
        %v1391 = vmul.f32 %v1384, %v1389
        %v1393 = vrot.slane %v1391, 1
        %v1395 = vadd.f32 %v1387, %v1393
        %v1396 = vsub.f32 0.0, %v1384
        %v1397 = vrot.slane %v290, 4
        %v1399 = vmul.f32 %v1396, %v1397
        %v1400 = vrot.slane %v290, 7
        %v1402 = vmul.f32 %v1384, %v1400
        %v1404 = vrot.slane %v1402, 1
        %v1406 = vadd.f32 %v1399, %v1404
        %v1408 = vrot.slane %v1406, 7
        %v1410 = vsel %vm1329, %v1395, %v1408
        %vm1411 = vcmask 1041408
        %v1412 = vsel %vm1411, %v1410, %v1384
        %1413 = vst [vmem:[%s283] sm:$0x7] %v1412
        %s1414 = sand.u32 %s120, 1
        %s1415 = scalar_lea.sflag [#allocation5], %s1414
        %s1416 = sand.u32 %s120, 1
        %s1417 = smul.addr %s1416, 4
        %s1418 = scalar_lea.vmem [#allocation4], %s1417
        // Predicated region
        $region78: #{tpu_custom_call.1} parent=72 // pred_check
          %p1419 = pneg %p130
        $region79: #{tpu_custom_call.1} parent=72 // pred_check_branch
          %1421 = sbr.rel (%p1419) target = $region81
        $region80: #{tpu_custom_call.1} parent=72 // pred_region
          %1423 = vsyncadd %s1415, 0
          %s1424 = smul.addr %s18, 4
          %s1425 = scalar_lea.hbm %s4, %s1424
          %s1427 = sshll.u32 %s1418, 4
          %s1428 = int_to_ptr.vmem [resolvable:$true] %s1427
          %s1429 = sshll.u32 %s1425, 4
          %s1430 = int_to_ptr.hbm [resolvable:$true] %s1429
          %1432 = dma.vmem_to_hbm [thread:$0]  %s1428, 64, %s1430, %s1415
        $region81: #{tpu_custom_call.1} parent=72 // pred_fallthru
          _
      $region73: #{tpu_custom_call.1} parent=5 // pred_fallthru
        _
      %p1433 = scmp.le.s32.totalorder 2, %s13
      // Predicated region
      $region82: #{tpu_custom_call.1} parent=5 // pred_check
        %p1434 = pneg %p1433
      $region83: #{tpu_custom_call.1} parent=5 // pred_check_branch
        %1436 = sbr.rel (%p1434) target = $region85
      $region84: #{tpu_custom_call.1} parent=5 // pred_region
        %s1437 = ssub.s32 %s13, 2
        // Predicated region
        $region86: #{tpu_custom_call.1} parent=84 // pred_check
          %p1438 = pneg %p136
        $region87: #{tpu_custom_call.1} parent=84 // pred_check_branch
          %1440 = sbr.rel (%p1438) target = $region89
        $region88: #{tpu_custom_call.1} parent=84 // pred_region
          %s1441 = sand.u32 %s121, 1
          %s1442 = scalar_lea.sflag [#allocation5], %s1441
          %s1443 = sand.u32 %s121, 1
          %s1444 = smul.addr %s1443, 4
          %s1445 = scalar_lea.vmem [#allocation4], %s1444
          %1447 = dma.done %s1442, 64
        $region89: #{tpu_custom_call.1} parent=84 // pred_fallthru
          _
      $region85: #{tpu_custom_call.1} parent=5 // pred_fallthru
        _
    $region6: #{tpu_custom_call.1} parent=1 // loop_footer
      %s17 = sadd.s32 1, %s13
    $region7: #{tpu_custom_call.1} parent=1 // loop_footer_branch
      %12 = sbr.rel target = $region3
    $region8: #{tpu_custom_call.1} parent=1 // loop_exit
      _
    %1448 = vsyncpa [#allocation5], 1
    %s1449 = scalar_lea.sflag [#allocation5], 1
    %1450 = vsyncpa %s1449, 1

</llo_original>
